<compile_context>
chip_gen: v7x
topology: tpu7x:2x2x1
jax: 0.10.0
libtpu: 0.0.40
codegen_flags: <defaults>
</compile_context>

<pallas_src>
import jax
import jax.numpy as jnp
from jax.experimental import pallas as pl
from jax.experimental.pallas import tpu as pltpu


def attn_layer_kernel(items_ref, user_ref, mask_ref,
                      w1i_ref, w1u_ref, b1_ref, w2_ref,
                      out_ref):
    BB, N, E = items_ref.shape
    f32 = jnp.float32

    items = items_ref[...]                                        # (BB, N, E), streaming dtype

    # user term once per batch row (not per item): (BB,E) @ (E,E), f32 accumulation.
    uh = (jnp.dot(user_ref[...], w1u_ref[...], preferred_element_type=f32)
          + b1_ref[...])                                          # (BB, E) f32

    # items term: one tall MXU matmul over the flattened (BB*N, E) tile.
    ih = jnp.dot(items.reshape(BB * N, E), w1i_ref[...],
                 preferred_element_type=f32).reshape(BB, N, E)    # (BB, N, E) f32

    # attn1(cat([items, user], -1)) + b1, then ReLU.
    h = jnp.maximum(ih + uh[:, None, :], 0.0)                     # (BB, N, E) f32
    # TODO(synk): nn.Dropout is identity in eval/inference mode; training-mode dropout not implemented.

    # attn2 scores kept in (BB, N, 1) sublane layout; the mask arrives pre-shaped
    # (BB, N, 1) so there is no lane<->sublane relayout anywhere in the softmax path.
    score = jnp.sum(h * w2_ref[...], axis=-1, keepdims=True) + mask_ref[...]   # (BB, N, 1)
    # NOTE: b2 is intentionally omitted — softmax is shift-invariant.

    # softmax over the item axis (sublane reduces).  p is NOT normalized here; the
    # (BB, E) accumulator is scaled by the reciprocal (EUP slot) in the epilogue.
    m = jnp.max(score, axis=1, keepdims=True)                     # (BB, 1, 1)
    p = jnp.exp(score - m)                                        # (BB, N, 1)
    l = jnp.sum(p, axis=1, keepdims=True)                         # (BB, 1, 1)

    acc = jnp.sum(p * items.astype(f32), axis=1)                  # (BB, E) f32
    out = acc * pl.reciprocal(l[:, 0, :], approx=True)            # (BB, E) * (BB, 1)
    # NOTE: if E < 128 this is a masked partial-lane store; pad E to 128 upstream
    # if this layer ever dominates and E is model-fixed below 128.
    out_ref[...] = out.astype(out_ref.dtype)


def _choose_block_b(B, N, E, in_itemsize, out_itemsize=4, w_itemsize=2,
                    tile_budget_bytes=28 * 1024 * 1024):
    """Pick the batch block BB.

    Accounts for the x2 double-buffer on every streamed tile (items, user, mask,
    out), the lane-padded VMEM layout of the (N, 1) f32 mask tile, and the f32
    (BB, N, E) in-kernel intermediate; resident weights (worst case: still
    double-buffered) are subtracted from the budget.  Respects the BlockSpec
    sublane rule (BB % 8 == 0 or BB == B) and prefers >=4 even grid steps so
    v7x's two TensorCores each get >=2 pipelined steps.  On v5e/v6e (128 MiB
    VMEM) raise tile_budget_bytes for a larger BB / fewer grid steps.
    """
    mask_row = (-(-N // 8)) * 8 * 128 * 4          # lane-padded f32 VMEM tile per row
    per_row = (2 * (N * E + E) * in_itemsize       # items + user tiles, double-buffered
               + 2 * mask_row                      # mask tile, double-buffered
               + 2 * E * out_itemsize              # output tile, double-buffered
               + N * E * 4 + E * 4)                # f32 intermediates (h, uh)
    weight_bytes = 2 * (2 * E * E * w_itemsize + 2 * E * 4)   # assume double-buffered
    budget = max(per_row, tile_budget_bytes - weight_bytes)
    cap = max(1, budget // per_row)

    cands = [bb for bb in range(1, B + 1)
             if B % bb == 0 and (bb % 8 == 0 or bb == B)]
    fitting = [bb for bb in cands if bb <= cap] or [cands[0]]
    for min_steps, need_even in ((4, True), (2, False), (1, False)):
        ok = [bb for bb in fitting
              if B // bb >= min_steps and (not need_even or (B // bb) % 2 == 0)]
        if ok:
            return max(ok)
    return max(fitting)


def attn_layer(user, items, items_mask, params, *, block_b=None,
               compute_dtype=jnp.bfloat16, out_dtype=jnp.float32,
               tile_budget_bytes=28 * 1024 * 1024,
               vmem_limit_bytes=48 * 1024 * 1024):
    """Pallas forward of AttnLayer (eval mode).

    Streams items/user/W1 in `compute_dtype` (bf16 by default) with f32
    accumulation.  Set out_dtype=jnp.bfloat16 if downstream allows to halve
    output writeback.
    """
    B, N, E = items.shape
    w1i, w1u, b1, w2, _b2 = params            # b2 unused: softmax is shift-invariant

    cdt = jnp.dtype(compute_dtype)
    items_c = items.astype(cdt)
    user_c = user.astype(cdt)
    w1i_c = w1i.astype(cdt)
    w1u_c = w1u.astype(cdt)
    b1_r = jnp.asarray(b1, jnp.float32).reshape(1, E)     # tiny rows stay f32
    w2_r = jnp.asarray(w2, jnp.float32).reshape(1, E)
    # (B, N, 1): N lands on sublanes so the whole score/softmax path stays in
    # sublane layout.  (For very large N, the lane-padded mask tile gets costly;
    # _choose_block_b accounts for it.)
    mask3 = items_mask.astype(jnp.float32).reshape(B, N, 1)

    if block_b is None:
        block_b = _choose_block_b(B, N, E, cdt.itemsize,
                                  out_itemsize=jnp.dtype(out_dtype).itemsize,
                                  w_itemsize=cdt.itemsize,
                                  tile_budget_bytes=tile_budget_bytes)
    BB = block_b
    assert B % BB == 0 and (BB % 8 == 0 or BB == B), (B, BB)

    def build(single_buffer_weights):
        if single_buffer_weights:
            # grid-invariant weights: double-buffering them is pure VMEM waste
            def w_spec(shape):
                return pl.BlockSpec(shape, lambda b: (0, 0),
                                    pipeline_mode=pl.Buffered(1))
        else:
            def w_spec(shape):
                return pl.BlockSpec(shape, lambda b: (0, 0))
        return pl.pallas_call(
            attn_layer_kernel,
            out_shape=jax.ShapeDtypeStruct((B, E), out_dtype),
            grid_spec=pl.GridSpec(
                grid=(B // BB,),
                in_specs=[
                    pl.BlockSpec((BB, N, E), lambda b: (b, 0, 0)),   # items (streamed)
                    pl.BlockSpec((BB, E), lambda b: (b, 0)),         # user  (streamed)
                    pl.BlockSpec((BB, N, 1), lambda b: (b, 0, 0)),   # additive mask
                    w_spec((E, E)),                                  # W1 items half (resident)
                    w_spec((E, E)),                                  # W1 user half (resident)
                    w_spec((1, E)),                                  # b1 row
                    w_spec((1, E)),                                  # w2 row
                ],
                out_specs=pl.BlockSpec((BB, E), lambda b: (b, 0)),   # dense store
            ),
            compiler_params=pltpu.CompilerParams(
                dimension_semantics=("parallel",),
                vmem_limit_bytes=vmem_limit_bytes,
            ),
        )

    args = (items_c, user_c, mask3, w1i_c, w1u_c, b1_r, w2_r)
    try:
        return build(True)(*args)
    except Exception:
        # pipeline_mode=pl.Buffered(1) not supported by this jax build: fall back
        # to default (double-buffered) weight specs — same math, a bit more VMEM.
        return build(False)(*args)


def init_params(key, edim):
    """Deterministic init matching nn.Linear shapes; weights xavier_normal_."""
    k1, k2, k3, k4 = jax.random.split(key, 4)
    # attn1: Linear(2E, E) -> torch weight (E, 2E)
    std1 = (2.0 / (2 * edim + edim)) ** 0.5
    W1 = jax.random.normal(k1, (edim, 2 * edim), jnp.float32) * std1
    b1 = jax.random.uniform(k2, (edim,), jnp.float32, -1.0, 1.0) * (1.0 / (2 * edim) ** 0.5)
    # attn2: Linear(E, 1) -> torch weight (1, E)
    std2 = (2.0 / (edim + 1)) ** 0.5
    W2 = jax.random.normal(k3, (1, edim), jnp.float32) * std2
    b2 = jax.random.uniform(k4, (1,), jnp.float32, -1.0, 1.0) * (1.0 / edim ** 0.5)
    # pre-transpose so the kernel computes x @ W (row-vector convention)
    w1i = W1[:, :edim].T            # (E, E)  acts on `items`
    w1u = W1[:, edim:].T            # (E, E)  acts on `user`
    return (w1i, w1u, b1.reshape(1, edim), W2, b2.reshape(1, 1))


def reference(user, items, items_mask, params):
    """Pure-JAX reference mirroring the PyTorch forward (eval mode)."""
    w1i, w1u, b1, w2, b2 = params
    u = jnp.broadcast_to(user[:, None, :], items.shape)
    h = jax.nn.relu(items @ w1i + u @ w1u + b1)                       # attn1 + ReLU
    s = jnp.sum(h * w2, axis=-1) + b2.reshape(()) \
        + items_mask.astype(jnp.float32)                              # attn2 + mask
    a = jax.nn.softmax(s, axis=1)
    return (a[..., None] * items).sum(axis=1)


if __name__ == "__main__":
    B, N, E = 16, 8, 32
    key = jax.random.PRNGKey(0)
    kp, ku, ki, km = jax.random.split(key, 4)

    params = init_params(kp, E)
    user = jax.random.normal(ku, (B, E), jnp.float32)
    items = jax.random.normal(ki, (B, N, E), jnp.float32)
    # additive mask: 0 for valid items, large negative for masked-out items
    keep = jax.random.bernoulli(km, 0.75, (B, N))
    items_mask = jnp.where(keep, 0.0, -1e9).astype(jnp.float32)
    items_mask = items_mask.at[:, 0].set(0.0)  # at least one valid item per row

    out = attn_layer(user, items, items_mask, params)
    out = jax.block_until_ready(out)
    assert out.shape == (B, E)

    # Reference computed on the same bf16-cast streamed tensors the kernel sees,
    # so the comparison isolates the kernel math (accumulation is f32 in both).
    def _cast(x):
        return x.astype(jnp.bfloat16).astype(jnp.float32)
    w1i, w1u, b1, w2, b2 = params
    ref = reference(_cast(user), _cast(items), items_mask,
                    (_cast(w1i), _cast(w1u), b1, w2, b2))
    max_err = float(jnp.max(jnp.abs(out - ref)))
    assert jnp.allclose(out, ref, atol=2e-2, rtol=2e-2), max_err

    print("KERNEL_OK")
</pallas_src>

<mosaic_0001>
module attributes {stable_mosaic.version = 11 : i64} {
  func.func @attn_layer_kernel(%arg0: i32, %arg1: memref<8x8x32xbf16, #tpu.memory_space<vmem>>, %arg2: memref<8x32xbf16, #tpu.memory_space<vmem>>, %arg3: memref<8x8x1xf32, #tpu.memory_space<vmem>>, %arg4: memref<32x32xbf16, #tpu.memory_space<vmem>>, %arg5: memref<32x32xbf16, #tpu.memory_space<vmem>>, %arg6: memref<1x32xf32, #tpu.memory_space<vmem>>, %arg7: memref<1x32xf32, #tpu.memory_space<vmem>>, %arg8: memref<8x32xf32, #tpu.memory_space<vmem>>) attributes {dimension_semantics = [#tpu.dimension_semantics<parallel>], iteration_bounds = array<i64: 2>, scalar_prefetch = 0 : i64, scratch_operands = 0 : i64, tpu.core_type = #tpu.core_type<tc>, window_params = [{transform_indices = @transform_0, window_bounds = array<i64: 8, 8, 32>}, {transform_indices = @transform_1, window_bounds = array<i64: 8, 32>}, {transform_indices = @transform_2, window_bounds = array<i64: 8, 8, 1>}, {pipeline_mode = #tpu.pipeline_mode<synchronous>, transform_indices = @transform_3, window_bounds = array<i64: 32, 32>}, {pipeline_mode = #tpu.pipeline_mode<synchronous>, transform_indices = @transform_4, window_bounds = array<i64: 32, 32>}, {pipeline_mode = #tpu.pipeline_mode<synchronous>, transform_indices = @transform_5, window_bounds = array<i64: 1, 32>}, {pipeline_mode = #tpu.pipeline_mode<synchronous>, transform_indices = @transform_6, window_bounds = array<i64: 1, 32>}, {transform_indices = @transform_7, window_bounds = array<i64: 8, 32>}]} {
    %c0 = arith.constant 0 : index
    %c0_0 = arith.constant 0 : index
    %c0_1 = arith.constant 0 : index
    %0 = vector.load %arg1[%c0, %c0_0, %c0_1] : memref<8x8x32xbf16, #tpu.memory_space<vmem>>, vector<8x8x32xbf16>
    %c0_2 = arith.constant 0 : index
    %c0_3 = arith.constant 0 : index
    %1 = vector.load %arg2[%c0_2, %c0_3] : memref<8x32xbf16, #tpu.memory_space<vmem>>, vector<8x32xbf16>
    %c0_4 = arith.constant 0 : index
    %c0_5 = arith.constant 0 : index
    %2 = vector.load %arg5[%c0_4, %c0_5] : memref<32x32xbf16, #tpu.memory_space<vmem>>, vector<32x32xbf16>
    %cst = arith.constant dense<0.000000e+00> : vector<8x32xf32>
    %3 = tpu.matmul %1, %2, %cst {dimension_numbers = #tpu.dot_dimension_numbers<[1], [0], [0], [1], [0, 0, 1, 1], [], []>} : vector<8x32xbf16>, vector<32x32xbf16>, vector<8x32xf32> -> vector<8x32xf32>
    %c0_6 = arith.constant 0 : index
    %c0_7 = arith.constant 0 : index
    %4 = vector.load %arg6[%c0_6, %c0_7] : memref<1x32xf32, #tpu.memory_space<vmem>>, vector<1x32xf32>
    %5 = vector.broadcast %4 : vector<1x32xf32> to vector<8x32xf32>
    %6 = arith.addf %3, %5 : vector<8x32xf32>
    %7 = vector.shape_cast %0 : vector<8x8x32xbf16> to vector<64x32xbf16>
    %c0_8 = arith.constant 0 : index
    %c0_9 = arith.constant 0 : index
    %8 = vector.load %arg4[%c0_8, %c0_9] : memref<32x32xbf16, #tpu.memory_space<vmem>>, vector<32x32xbf16>
    %cst_10 = arith.constant dense<0.000000e+00> : vector<64x32xf32>
    %9 = tpu.matmul %7, %8, %cst_10 {dimension_numbers = #tpu.dot_dimension_numbers<[1], [0], [0], [1], [0, 0, 1, 1], [], []>} : vector<64x32xbf16>, vector<32x32xbf16>, vector<64x32xf32> -> vector<64x32xf32>
    %10 = vector.shape_cast %9 : vector<64x32xf32> to vector<8x8x32xf32>
    %11 = vector.shape_cast %6 : vector<8x32xf32> to vector<8x1x32xf32>
    %12 = vector.broadcast %11 : vector<8x1x32xf32> to vector<8x8x32xf32>
    %13 = arith.addf %10, %12 : vector<8x8x32xf32>
    %cst_11 = arith.constant 0.000000e+00 : f32
    %14 = vector.broadcast %cst_11 : f32 to vector<8x8x32xf32>
    %15 = arith.maximumf %13, %14 : vector<8x8x32xf32>
    %c0_12 = arith.constant 0 : index
    %c0_13 = arith.constant 0 : index
    %16 = vector.load %arg7[%c0_12, %c0_13] : memref<1x32xf32, #tpu.memory_space<vmem>>, vector<1x32xf32>
    %17 = vector.shape_cast %16 : vector<1x32xf32> to vector<1x1x32xf32>
    %18 = vector.broadcast %17 : vector<1x1x32xf32> to vector<8x8x32xf32>
    %19 = arith.mulf %15, %18 : vector<8x8x32xf32>
    %cst_14 = arith.constant dense<0.000000e+00> : vector<8x8xf32>
    %20 = vector.multi_reduction <add>, %19, %cst_14 [2] : vector<8x8x32xf32> to vector<8x8xf32>
    %21 = vector.shape_cast %20 : vector<8x8xf32> to vector<8x8x1xf32>
    %c0_15 = arith.constant 0 : index
    %c0_16 = arith.constant 0 : index
    %c0_17 = arith.constant 0 : index
    %22 = vector.load %arg3[%c0_15, %c0_16, %c0_17] : memref<8x8x1xf32, #tpu.memory_space<vmem>>, vector<8x8x1xf32>
    %23 = arith.addf %21, %22 : vector<8x8x1xf32>
    %cst_18 = arith.constant dense<0xFF800000> : vector<8x1xf32>
    %24 = vector.multi_reduction <maximumf>, %23, %cst_18 [1] : vector<8x8x1xf32> to vector<8x1xf32>
    %25 = vector.shape_cast %24 : vector<8x1xf32> to vector<8x1x1xf32>
    %26 = vector.broadcast %25 : vector<8x1x1xf32> to vector<8x8x1xf32>
    %27 = arith.subf %23, %26 : vector<8x8x1xf32>
    %28 = math.exp %27 : vector<8x8x1xf32>
    %cst_19 = arith.constant dense<0.000000e+00> : vector<8x1xf32>
    %29 = vector.multi_reduction <add>, %28, %cst_19 [1] : vector<8x8x1xf32> to vector<8x1xf32>
    %30 = vector.shape_cast %29 : vector<8x1xf32> to vector<8x1x1xf32>
    %31 = arith.extf %0 : vector<8x8x32xbf16> to vector<8x8x32xf32>
    %32 = vector.broadcast %28 : vector<8x8x1xf32> to vector<8x8x32xf32>
    %33 = arith.mulf %32, %31 : vector<8x8x32xf32>
    %cst_20 = arith.constant dense<0.000000e+00> : vector<8x32xf32>
    %34 = vector.multi_reduction <add>, %33, %cst_20 [1] : vector<8x8x32xf32> to vector<8x32xf32>
    %35 = vector.shape_cast %30 : vector<8x1x1xf32> to vector<8x1xf32>
    %36 = tpu.reciprocal %35 {approx = true} : vector<8x1xf32> -> vector<8x1xf32>
    %37 = vector.broadcast %36 : vector<8x1xf32> to vector<8x32xf32>
    %38 = arith.mulf %34, %37 : vector<8x32xf32>
    %c0_21 = arith.constant 0 : index
    %c0_22 = arith.constant 0 : index
    %39 = vector.load %arg8[%c0_21, %c0_22] : memref<8x32xf32, #tpu.memory_space<vmem>>, vector<8x32xf32>
    tpu.vector_store %arg8[%c0_21, %c0_22], %38 {strides = array<i32>} : memref<8x32xf32, #tpu.memory_space<vmem>>, vector<8x32xf32>,
    return
  }
  func.func @transform_0(%arg0: i32) -> (i32, i32, i32) {
    %c0_i32 = arith.constant 0 : i32
    %c0_i32_0 = arith.constant 0 : i32
    %c0_i32_1 = arith.constant 0 : i32
    return %arg0, %c0_i32, %c0_i32_0 : i32, i32, i32
  }
  func.func @transform_1(%arg0: i32) -> (i32, i32) {
    %c0_i32 = arith.constant 0 : i32
    %c0_i32_0 = arith.constant 0 : i32
    return %arg0, %c0_i32 : i32, i32
  }
  func.func @transform_2(%arg0: i32) -> (i32, i32, i32) {
    %c0_i32 = arith.constant 0 : i32
    %c0_i32_0 = arith.constant 0 : i32
    %c0_i32_1 = arith.constant 0 : i32
    return %arg0, %c0_i32, %c0_i32_0 : i32, i32, i32
  }
  func.func @transform_3(%arg0: i32) -> (i32, i32) {
    %c0_i32 = arith.constant 0 : i32
    %c0_i32_0 = arith.constant 0 : i32
    %c0_i32_1 = arith.constant 0 : i32
    return %c0_i32, %c0_i32_0 : i32, i32
  }
  func.func @transform_4(%arg0: i32) -> (i32, i32) {
    %c0_i32 = arith.constant 0 : i32
    %c0_i32_0 = arith.constant 0 : i32
    %c0_i32_1 = arith.constant 0 : i32
    return %c0_i32, %c0_i32_0 : i32, i32
  }
  func.func @transform_5(%arg0: i32) -> (i32, i32) {
    %c0_i32 = arith.constant 0 : i32
    %c0_i32_0 = arith.constant 0 : i32
    %c0_i32_1 = arith.constant 0 : i32
    return %c0_i32, %c0_i32_0 : i32, i32
  }
  func.func @transform_6(%arg0: i32) -> (i32, i32) {
    %c0_i32 = arith.constant 0 : i32
    %c0_i32_0 = arith.constant 0 : i32
    %c0_i32_1 = arith.constant 0 : i32
    return %c0_i32, %c0_i32_0 : i32, i32
  }
  func.func @transform_7(%arg0: i32) -> (i32, i32) {
    %c0_i32 = arith.constant 0 : i32
    %c0_i32_0 = arith.constant 0 : i32
    return %arg0, %c0_i32 : i32, i32
  }
}

module attributes {stable_mosaic.version = 11 : i64} {
  func.func @attn_layer_kernel(%arg0: i32, %arg1: memref<8x8x32xbf16, #tpu.memory_space<vmem>>, %arg2: memref<8x32xbf16, #tpu.memory_space<vmem>>, %arg3: memref<8x8x1xf32, #tpu.memory_space<vmem>>, %arg4: memref<32x32xbf16, #tpu.memory_space<vmem>>, %arg5: memref<32x32xbf16, #tpu.memory_space<vmem>>, %arg6: memref<1x32xf32, #tpu.memory_space<vmem>>, %arg7: memref<1x32xf32, #tpu.memory_space<vmem>>, %arg8: memref<8x32xf32, #tpu.memory_space<vmem>>) attributes {dimension_semantics = [#tpu.dimension_semantics<parallel>], iteration_bounds = array<i64: 2>, scalar_prefetch = 0 : i64, scratch_operands = 0 : i64, tpu.core_type = #tpu.core_type<tc>, window_params = [{transform_indices = @transform_0, window_bounds = array<i64: 8, 8, 32>}, {transform_indices = @transform_1, window_bounds = array<i64: 8, 32>}, {transform_indices = @transform_2, window_bounds = array<i64: 8, 8, 1>}, {pipeline_mode = #tpu.pipeline_mode<synchronous>, transform_indices = @transform_3, window_bounds = array<i64: 32, 32>}, {pipeline_mode = #tpu.pipeline_mode<synchronous>, transform_indices = @transform_4, window_bounds = array<i64: 32, 32>}, {pipeline_mode = #tpu.pipeline_mode<synchronous>, transform_indices = @transform_5, window_bounds = array<i64: 1, 32>}, {pipeline_mode = #tpu.pipeline_mode<synchronous>, transform_indices = @transform_6, window_bounds = array<i64: 1, 32>}, {transform_indices = @transform_7, window_bounds = array<i64: 8, 32>}]} {
    %c0 = arith.constant 0 : index
    %c0_0 = arith.constant 0 : index
    %c0_1 = arith.constant 0 : index
    %0 = vector.load %arg1[%c0, %c0_0, %c0_1] : memref<8x8x32xbf16, #tpu.memory_space<vmem>>, vector<8x8x32xbf16>
    %c0_2 = arith.constant 0 : index
    %c0_3 = arith.constant 0 : index
    %1 = vector.load %arg2[%c0_2, %c0_3] : memref<8x32xbf16, #tpu.memory_space<vmem>>, vector<8x32xbf16>
    %c0_4 = arith.constant 0 : index
    %c0_5 = arith.constant 0 : index
    %2 = vector.load %arg5[%c0_4, %c0_5] : memref<32x32xbf16, #tpu.memory_space<vmem>>, vector<32x32xbf16>
    %cst = arith.constant dense<0.000000e+00> : vector<8x32xf32>
    %3 = tpu.matmul %1, %2, %cst {dimension_numbers = #tpu.dot_dimension_numbers<[1], [0], [0], [1], [0, 0, 1, 1], [], []>} : vector<8x32xbf16>, vector<32x32xbf16>, vector<8x32xf32> -> vector<8x32xf32>
    %c0_6 = arith.constant 0 : index
    %c0_7 = arith.constant 0 : index
    %4 = vector.load %arg6[%c0_6, %c0_7] : memref<1x32xf32, #tpu.memory_space<vmem>>, vector<1x32xf32>
    %5 = vector.broadcast %4 : vector<1x32xf32> to vector<8x32xf32>
    %6 = arith.addf %3, %5 : vector<8x32xf32>
    %7 = vector.shape_cast %0 : vector<8x8x32xbf16> to vector<64x32xbf16>
    %c0_8 = arith.constant 0 : index
    %c0_9 = arith.constant 0 : index
    %8 = vector.load %arg4[%c0_8, %c0_9] : memref<32x32xbf16, #tpu.memory_space<vmem>>, vector<32x32xbf16>
    %cst_10 = arith.constant dense<0.000000e+00> : vector<64x32xf32>
    %9 = tpu.matmul %7, %8, %cst_10 {dimension_numbers = #tpu.dot_dimension_numbers<[1], [0], [0], [1], [0, 0, 1, 1], [], []>} : vector<64x32xbf16>, vector<32x32xbf16>, vector<64x32xf32> -> vector<64x32xf32>
    %10 = vector.shape_cast %9 : vector<64x32xf32> to vector<8x8x32xf32>
    %11 = vector.shape_cast %6 : vector<8x32xf32> to vector<8x1x32xf32>
    %12 = vector.broadcast %11 : vector<8x1x32xf32> to vector<8x8x32xf32>
    %13 = arith.addf %10, %12 : vector<8x8x32xf32>
    %cst_11 = arith.constant 0.000000e+00 : f32
    %14 = vector.broadcast %cst_11 : f32 to vector<8x8x32xf32>
    %15 = arith.maximumf %13, %14 : vector<8x8x32xf32>
    %c0_12 = arith.constant 0 : index
    %c0_13 = arith.constant 0 : index
    %16 = vector.load %arg7[%c0_12, %c0_13] : memref<1x32xf32, #tpu.memory_space<vmem>>, vector<1x32xf32>
    %17 = vector.shape_cast %16 : vector<1x32xf32> to vector<1x1x32xf32>
    %18 = vector.broadcast %17 : vector<1x1x32xf32> to vector<8x8x32xf32>
    %19 = arith.mulf %15, %18 : vector<8x8x32xf32>
    %cst_14 = arith.constant dense<0.000000e+00> : vector<8x8xf32>
    %20 = vector.multi_reduction <add>, %19, %cst_14 [2] : vector<8x8x32xf32> to vector<8x8xf32>
    %21 = vector.shape_cast %20 : vector<8x8xf32> to vector<8x8x1xf32>
    %c0_15 = arith.constant 0 : index
    %c0_16 = arith.constant 0 : index
    %c0_17 = arith.constant 0 : index
    %22 = vector.load %arg3[%c0_15, %c0_16, %c0_17] : memref<8x8x1xf32, #tpu.memory_space<vmem>>, vector<8x8x1xf32>
    %23 = arith.addf %21, %22 : vector<8x8x1xf32>
    %cst_18 = arith.constant dense<0xFF800000> : vector<8x1xf32>
    %24 = vector.multi_reduction <maximumf>, %23, %cst_18 [1] : vector<8x8x1xf32> to vector<8x1xf32>
    %25 = vector.shape_cast %24 : vector<8x1xf32> to vector<8x1x1xf32>
    %26 = vector.broadcast %25 : vector<8x1x1xf32> to vector<8x8x1xf32>
    %27 = arith.subf %23, %26 : vector<8x8x1xf32>
    %28 = math.exp %27 : vector<8x8x1xf32>
    %cst_19 = arith.constant dense<0.000000e+00> : vector<8x1xf32>
    %29 = vector.multi_reduction <add>, %28, %cst_19 [1] : vector<8x8x1xf32> to vector<8x1xf32>
    %30 = vector.shape_cast %29 : vector<8x1xf32> to vector<8x1x1xf32>
    %31 = arith.extf %0 : vector<8x8x32xbf16> to vector<8x8x32xf32>
    %32 = vector.broadcast %28 : vector<8x8x1xf32> to vector<8x8x32xf32>
    %33 = arith.mulf %32, %31 : vector<8x8x32xf32>
    %cst_20 = arith.constant dense<0.000000e+00> : vector<8x32xf32>
    %34 = vector.multi_reduction <add>, %33, %cst_20 [1] : vector<8x8x32xf32> to vector<8x32xf32>
    %35 = vector.shape_cast %30 : vector<8x1x1xf32> to vector<8x1xf32>
    %36 = tpu.reciprocal %35 {approx = true} : vector<8x1xf32> -> vector<8x1xf32>
    %37 = vector.broadcast %36 : vector<8x1xf32> to vector<8x32xf32>
    %38 = arith.mulf %34, %37 : vector<8x32xf32>
    %c0_21 = arith.constant 0 : index
    %c0_22 = arith.constant 0 : index
    %39 = vector.load %arg8[%c0_21, %c0_22] : memref<8x32xf32, #tpu.memory_space<vmem>>, vector<8x32xf32>
    tpu.vector_store %arg8[%c0_21, %c0_22], %38 {strides = array<i32>} : memref<8x32xf32, #tpu.memory_space<vmem>>, vector<8x32xf32>,
    return
  }
  func.func @transform_0(%arg0: i32) -> (i32, i32, i32) {
    %c0_i32 = arith.constant 0 : i32
    %c0_i32_0 = arith.constant 0 : i32
    %c0_i32_1 = arith.constant 0 : i32
    return %arg0, %c0_i32, %c0_i32_0 : i32, i32, i32
  }
  func.func @transform_1(%arg0: i32) -> (i32, i32) {
    %c0_i32 = arith.constant 0 : i32
    %c0_i32_0 = arith.constant 0 : i32
    return %arg0, %c0_i32 : i32, i32
  }
  func.func @transform_2(%arg0: i32) -> (i32, i32, i32) {
    %c0_i32 = arith.constant 0 : i32
    %c0_i32_0 = arith.constant 0 : i32
    %c0_i32_1 = arith.constant 0 : i32
    return %arg0, %c0_i32, %c0_i32_0 : i32, i32, i32
  }
  func.func @transform_3(%arg0: i32) -> (i32, i32) {
    %c0_i32 = arith.constant 0 : i32
    %c0_i32_0 = arith.constant 0 : i32
    %c0_i32_1 = arith.constant 0 : i32
    return %c0_i32, %c0_i32_0 : i32, i32
  }
  func.func @transform_4(%arg0: i32) -> (i32, i32) {
    %c0_i32 = arith.constant 0 : i32
    %c0_i32_0 = arith.constant 0 : i32
    %c0_i32_1 = arith.constant 0 : i32
    return %c0_i32, %c0_i32_0 : i32, i32
  }
  func.func @transform_5(%arg0: i32) -> (i32, i32) {
    %c0_i32 = arith.constant 0 : i32
    %c0_i32_0 = arith.constant 0 : i32
    %c0_i32_1 = arith.constant 0 : i32
    return %c0_i32, %c0_i32_0 : i32, i32
  }
  func.func @transform_6(%arg0: i32) -> (i32, i32) {
    %c0_i32 = arith.constant 0 : i32
    %c0_i32_0 = arith.constant 0 : i32
    %c0_i32_1 = arith.constant 0 : i32
    return %c0_i32, %c0_i32_0 : i32, i32
  }
  func.func @transform_7(%arg0: i32) -> (i32, i32) {
    %c0_i32 = arith.constant 0 : i32
    %c0_i32_0 = arith.constant 0 : i32
    return %arg0, %c0_i32 : i32, i32
  }
}

</mosaic_0001>

<llo_original>
// kernel: tpu_custom_call.1
$region0: #{tpu_custom_call.1}
  #allocation0 [shape = 'u32[]', space=smem, size = 0x4, offset = 0x4, fixed_abs, tag = 'smem constant byte address 0x4 - core index']
  #allocation1 [shape = 'u32[144,128]{1,0:T(1,128)}', space=vmem, size = 0x12000, scoped, tag = 'internal scratch']
  %s0 = inlined_call_operand.vmem [shape: bf16[16,8,32], index: 0, kind: input, shape index: {}]
  %s1 = inlined_call_operand.vmem [shape: bf16[16,32], index: 1, kind: input, shape index: {}]
  %s2 = inlined_call_operand.vmem [shape: f32[16,8,1], index: 2, kind: input, shape index: {}]
  %s3 = inlined_call_operand.vmem [shape: bf16[32,32], index: 3, kind: input, shape index: {}]
  %s4 = inlined_call_operand.vmem [shape: bf16[32,32], index: 4, kind: input, shape index: {}]
  %s5 = inlined_call_operand.vmem [shape: f32[1,32], index: 5, kind: input, shape index: {}]
  %s6 = inlined_call_operand.vmem [shape: f32[1,32], index: 6, kind: input, shape index: {}]
  %s7 = inlined_call_operand.hbm [shape: f32[16,32], index: 7, kind: output, shape index: {}]
  %s8 = sld [smem:[#allocation0]]
  $region61: #{tpu_custom_call.1} parent=0
    _
  %s10 = ssub.s32 1, %s8
  %s11 = scalar_select 0, %s10, %s8
  $region1: #{tpu_custom_call.1} parent=0
    #allocation2 [shape = 'u8[8192]{0}', space=vmem, size = 0x2000, scoped, tag = 'output window, operand 0']
    #allocation3 [shape = 's32[2]{0}', space=sflag, size = 0x8, scoped, tag = 'scoped memory for tpu_custom_call.1']
    %12 = vsyncpa [#allocation3], 0
    %s13 = scalar_lea.sflag [#allocation3], 1
    %14 = vsyncpa %s13, 0
    loop: start=0, step=1, limit=4
    $region2: #{tpu_custom_call.1} parent=1 // loop_pre_header
      _
    $region3: #{tpu_custom_call.1} parent=1 // loop_header
      %s16 = sphi 0, %s20
      %p17 = scmp.ge.s32.totalorder %s16, 4
      %s26 = sphi 0, %s28
      %s29 = sphi 0, %s26
      %s30 = sphi 0, %s29
      %s46 = sphi 0, %s30
      %s52 = sphi 0, %s54
      %s55 = sphi 0, %s52
      %s56 = sphi 0, %s55
      %s72 = sphi 0, %s56
      %s78 = sphi 0, %s80
      %s81 = sphi 0, %s78
      %s82 = sphi 0, %s81
      %s98 = sphi 0, %s82
      %s102 = sphi 0, %s102
      %s104 = sphi 0, %s102
      %s105 = sphi 0, %s104
      %s119 = sphi 0, %s105
      %s123 = sphi 0, %s123
      %s125 = sphi 0, %s123
      %s126 = sphi 0, %s125
      %s140 = sphi 0, %s126
      %s144 = sphi 0, %s144
      %s146 = sphi 0, %s144
      %s147 = sphi 0, %s146
      %s161 = sphi 0, %s147
      %s165 = sphi 0, %s165
      %s167 = sphi 0, %s165
      %s168 = sphi 0, %s167
      %s182 = sphi 0, %s168
      %s188 = sphi 0, %s190
      %s191 = sphi 0, %s188
      %s192 = sphi 0, %s191
      %s208 = sphi 0, %s192
    $region4: #{tpu_custom_call.1} parent=1 // loop_header_branch
      %19 = sbr.rel (%p17) target = $region8
    $region5: #{tpu_custom_call.1} parent=1 // loop_body
      %s21 = ssub.s32 %s16, 1
      %s22 = ssub.s32 %s16, 2
      %s23 = sadd.s32 %s16, 1
      %s24 = ssub.s32 %s16, %s23
      %p25 = scmp.eq.s32.totalorder %s24, 0
      %s27 = sadd.s32 %s26, 1
      %s28 = scalar_select %p25, %s26, %s27
      %p31 = pneg %p25
      %p32 = scmp.eq.s32.totalorder %s16, 1
      %p33 = por %p31, %p32
      %p34 = scmp.ne.s32.totalorder %s26, %s29
      %p35 = scmp.eq.s32.totalorder %s16, 0
      %p36 = por %p34, %p35
      %p37 = scmp.ne.s32.totalorder %s26, %s29
      %p38 = scmp.eq.s32.totalorder %s21, 1
      %p39 = por %p37, %p38
      %p40 = scmp.ne.s32.totalorder %s29, %s30
      %p41 = scmp.eq.s32.totalorder %s21, 0
      %p42 = por %p40, %p41
      %p43 = scmp.ne.s32.totalorder %s29, %s30
      %p44 = scmp.eq.s32.totalorder %s22, 1
      %p45 = por %p43, %p44
      %p47 = scmp.ne.s32.totalorder %s30, %s46
      %p48 = scmp.eq.s32.totalorder %s22, 0
      %p49 = por %p47, %p48
      %s50 = ssub.s32 %s16, %s23
      %p51 = scmp.eq.s32.totalorder %s50, 0
      %s53 = sadd.s32 %s52, 1
      %s54 = scalar_select %p51, %s52, %s53
      %p57 = pneg %p51
      %p58 = scmp.eq.s32.totalorder %s16, 1
      %p59 = por %p57, %p58
      %p60 = scmp.ne.s32.totalorder %s52, %s55
      %p61 = scmp.eq.s32.totalorder %s16, 0
      %p62 = por %p60, %p61
      %p63 = scmp.ne.s32.totalorder %s52, %s55
      %p64 = scmp.eq.s32.totalorder %s21, 1
      %p65 = por %p63, %p64
      %p66 = scmp.ne.s32.totalorder %s55, %s56
      %p67 = scmp.eq.s32.totalorder %s21, 0
      %p68 = por %p66, %p67
      %p69 = scmp.ne.s32.totalorder %s55, %s56
      %p70 = scmp.eq.s32.totalorder %s22, 1
      %p71 = por %p69, %p70
      %p73 = scmp.ne.s32.totalorder %s56, %s72
      %p74 = scmp.eq.s32.totalorder %s22, 0
      %p75 = por %p73, %p74
      %s76 = ssub.s32 %s16, %s23
      %p77 = scmp.eq.s32.totalorder %s76, 0
      %s79 = sadd.s32 %s78, 1
      %s80 = scalar_select %p77, %s78, %s79
      %p83 = pneg %p77
      %p84 = scmp.eq.s32.totalorder %s16, 1
      %p85 = por %p83, %p84
      %p86 = scmp.ne.s32.totalorder %s78, %s81
      %p87 = scmp.eq.s32.totalorder %s16, 0
      %p88 = por %p86, %p87
      %p89 = scmp.ne.s32.totalorder %s78, %s81
      %p90 = scmp.eq.s32.totalorder %s21, 1
      %p91 = por %p89, %p90
      %p92 = scmp.ne.s32.totalorder %s81, %s82
      %p93 = scmp.eq.s32.totalorder %s21, 0
      %p94 = por %p92, %p93
      %p95 = scmp.ne.s32.totalorder %s81, %s82
      %p96 = scmp.eq.s32.totalorder %s22, 1
      %p97 = por %p95, %p96
      %p99 = scmp.ne.s32.totalorder %s82, %s98
      %p100 = scmp.eq.s32.totalorder %s22, 0
      %p101 = por %p99, %p100
      %s103 = sadd.s32 %s102, 1
      %p106 = scmp.eq.s32.totalorder %s16, 1
      %p107 = scmp.ne.s32.totalorder %s102, %s104
      %p108 = scmp.eq.s32.totalorder %s16, 0
      %p109 = por %p107, %p108
      %p110 = scmp.ne.s32.totalorder %s102, %s104
      %p111 = scmp.eq.s32.totalorder %s21, 1
      %p112 = por %p110, %p111
      %p113 = scmp.ne.s32.totalorder %s104, %s105
      %p114 = scmp.eq.s32.totalorder %s21, 0
      %p115 = por %p113, %p114
      %p116 = scmp.ne.s32.totalorder %s104, %s105
      %p117 = scmp.eq.s32.totalorder %s22, 1
      %p118 = por %p116, %p117
      %p120 = scmp.ne.s32.totalorder %s105, %s119
      %p121 = scmp.eq.s32.totalorder %s22, 0
      %p122 = por %p120, %p121
      %s124 = sadd.s32 %s123, 1
      %p127 = scmp.eq.s32.totalorder %s16, 1
      %p128 = scmp.ne.s32.totalorder %s123, %s125
      %p129 = scmp.eq.s32.totalorder %s16, 0
      %p130 = por %p128, %p129
      %p131 = scmp.ne.s32.totalorder %s123, %s125
      %p132 = scmp.eq.s32.totalorder %s21, 1
      %p133 = por %p131, %p132
      %p134 = scmp.ne.s32.totalorder %s125, %s126
      %p135 = scmp.eq.s32.totalorder %s21, 0
      %p136 = por %p134, %p135
      %p137 = scmp.ne.s32.totalorder %s125, %s126
      %p138 = scmp.eq.s32.totalorder %s22, 1
      %p139 = por %p137, %p138
      %p141 = scmp.ne.s32.totalorder %s126, %s140
      %p142 = scmp.eq.s32.totalorder %s22, 0
      %p143 = por %p141, %p142
      %s145 = sadd.s32 %s144, 1
      %p148 = scmp.eq.s32.totalorder %s16, 1
      %p149 = scmp.ne.s32.totalorder %s144, %s146
      %p150 = scmp.eq.s32.totalorder %s16, 0
      %p151 = por %p149, %p150
      %p152 = scmp.ne.s32.totalorder %s144, %s146
      %p153 = scmp.eq.s32.totalorder %s21, 1
      %p154 = por %p152, %p153
      %p155 = scmp.ne.s32.totalorder %s146, %s147
      %p156 = scmp.eq.s32.totalorder %s21, 0
      %p157 = por %p155, %p156
      %p158 = scmp.ne.s32.totalorder %s146, %s147
      %p159 = scmp.eq.s32.totalorder %s22, 1
      %p160 = por %p158, %p159
      %p162 = scmp.ne.s32.totalorder %s147, %s161
      %p163 = scmp.eq.s32.totalorder %s22, 0
      %p164 = por %p162, %p163
      %s166 = sadd.s32 %s165, 1
      %p169 = scmp.eq.s32.totalorder %s16, 1
      %p170 = scmp.ne.s32.totalorder %s165, %s167
      %p171 = scmp.eq.s32.totalorder %s16, 0
      %p172 = por %p170, %p171
      %p173 = scmp.ne.s32.totalorder %s165, %s167
      %p174 = scmp.eq.s32.totalorder %s21, 1
      %p175 = por %p173, %p174
      %p176 = scmp.ne.s32.totalorder %s167, %s168
      %p177 = scmp.eq.s32.totalorder %s21, 0
      %p178 = por %p176, %p177
      %p179 = scmp.ne.s32.totalorder %s167, %s168
      %p180 = scmp.eq.s32.totalorder %s22, 1
      %p181 = por %p179, %p180
      %p183 = scmp.ne.s32.totalorder %s168, %s182
      %p184 = scmp.eq.s32.totalorder %s22, 0
      %p185 = por %p183, %p184
      %s186 = ssub.s32 %s16, %s23
      %p187 = scmp.eq.s32.totalorder %s186, 0
      %s189 = sadd.s32 %s188, 1
      %s190 = scalar_select %p187, %s188, %s189
      %p193 = pneg %p187
      %p194 = scmp.eq.s32.totalorder %s16, 1
      %p195 = por %p193, %p194
      %p196 = scmp.ne.s32.totalorder %s188, %s191
      %p197 = scmp.eq.s32.totalorder %s16, 0
      %p198 = por %p196, %p197
      %p199 = scmp.ne.s32.totalorder %s188, %s191
      %p200 = scmp.eq.s32.totalorder %s21, 1
      %p201 = por %p199, %p200
      %p202 = scmp.ne.s32.totalorder %s191, %s192
      %p203 = scmp.eq.s32.totalorder %s21, 0
      %p204 = por %p202, %p203
      %p205 = scmp.ne.s32.totalorder %s191, %s192
      %p206 = scmp.eq.s32.totalorder %s22, 1
      %p207 = por %p205, %p206
      %p209 = scmp.ne.s32.totalorder %s192, %s208
      %p210 = scmp.eq.s32.totalorder %s22, 0
      %p211 = por %p209, %p210
      %p212 = scmp.le.s32.totalorder 1, %s16
      %p213 = scmp.lt.s32.totalorder %s16, 3
      %p214 = pnand %p212, %p213
      %p215 = pneg %p214
      // Predicated region
      $region9: #{tpu_custom_call.1} parent=5 // pred_check
        _
      $region10: #{tpu_custom_call.1} parent=5 // pred_check_branch
        %217 = sbr.rel (%p214) target = $region12
      $region11: #{tpu_custom_call.1} parent=5 // pred_region
        %s218 = ssub.s32 %s16, 1
        // Predicated region
        $region13: #{tpu_custom_call.1} parent=11 // pred_check
          %p219 = pneg %p115
        $region14: #{tpu_custom_call.1} parent=11 // pred_check_branch
          %221 = sbr.rel (%p219) target = $region16
        $region15: #{tpu_custom_call.1} parent=11 // pred_region
          _
        $region16: #{tpu_custom_call.1} parent=11 // pred_fallthru
          _
        // Predicated region
        $region17: #{tpu_custom_call.1} parent=11 // pred_check
          %p222 = pneg %p136
        $region18: #{tpu_custom_call.1} parent=11 // pred_check_branch
          %224 = sbr.rel (%p222) target = $region20
        $region19: #{tpu_custom_call.1} parent=11 // pred_region
          _
        $region20: #{tpu_custom_call.1} parent=11 // pred_fallthru
          _
        // Predicated region
        $region21: #{tpu_custom_call.1} parent=11 // pred_check
          %p225 = pneg %p157
        $region22: #{tpu_custom_call.1} parent=11 // pred_check_branch
          %227 = sbr.rel (%p225) target = $region24
        $region23: #{tpu_custom_call.1} parent=11 // pred_region
          _
        $region24: #{tpu_custom_call.1} parent=11 // pred_fallthru
          _
        // Predicated region
        $region25: #{tpu_custom_call.1} parent=11 // pred_check
          %p228 = pneg %p178
        $region26: #{tpu_custom_call.1} parent=11 // pred_check_branch
          %230 = sbr.rel (%p228) target = $region28
        $region27: #{tpu_custom_call.1} parent=11 // pred_region
          _
        $region28: #{tpu_custom_call.1} parent=11 // pred_fallthru
          _
      $region12: #{tpu_custom_call.1} parent=5 // pred_fallthru
        _
      %p231 = scmp.lt.s32.totalorder %s16, 2
      // Predicated region
      $region29: #{tpu_custom_call.1} parent=5 // pred_check
        %p232 = pneg %p231
      $region30: #{tpu_custom_call.1} parent=5 // pred_check_branch
        %234 = sbr.rel (%p232) target = $region32
      $region31: #{tpu_custom_call.1} parent=5 // pred_region
        // Predicated region
        $region33: #{tpu_custom_call.1} parent=31 // pred_check
          %p235 = pneg %p36
        $region34: #{tpu_custom_call.1} parent=31 // pred_check_branch
          %237 = sbr.rel (%p235) target = $region36
        $region35: #{tpu_custom_call.1} parent=31 // pred_region
          %s238 = smul.u32 8, %s16
          %p239 = scmp.lt.s32.totalorder %s238, 15
          %s240 = scalar_select %p239, %s238, 15
          %s241 = smul.addr %s240, 4
          %s242 = scalar_lea.vmem %s0, %s241
          %s243 = smul.u32 8, %s16
        $region36: #{tpu_custom_call.1} parent=31 // pred_fallthru
          _
        // Predicated region
        $region37: #{tpu_custom_call.1} parent=31 // pred_check
          %p244 = pneg %p62
        $region38: #{tpu_custom_call.1} parent=31 // pred_check_branch
          %246 = sbr.rel (%p244) target = $region40
        $region39: #{tpu_custom_call.1} parent=31 // pred_region
          %p247 = scmp.lt.s32.totalorder %s16, 1
          %s248 = scalar_select %p247, %s16, 1
          %s249 = smul.addr %s248, 4
          %s250 = scalar_lea.vmem %s1, %s249
        $region40: #{tpu_custom_call.1} parent=31 // pred_fallthru
          _
        // Predicated region
        $region41: #{tpu_custom_call.1} parent=31 // pred_check
          %p251 = pneg %p88
        $region42: #{tpu_custom_call.1} parent=31 // pred_check_branch
          %253 = sbr.rel (%p251) target = $region44
        $region43: #{tpu_custom_call.1} parent=31 // pred_region
          %s254 = smul.u32 8, %s16
          %p255 = scmp.lt.s32.totalorder %s254, 15
          %s256 = scalar_select %p255, %s254, 15
          %s257 = smul.addr %s256, 8
          %s258 = scalar_lea.vmem %s2, %s257
          %s259 = smul.u32 8, %s16
        $region44: #{tpu_custom_call.1} parent=31 // pred_fallthru
          _
      $region32: #{tpu_custom_call.1} parent=5 // pred_fallthru
        _
      %p260 = scmp.le.s32.totalorder 1, %s16
      %p261 = scmp.lt.s32.totalorder %s16, 3
      %p262 = pnand %p260, %p261
      %p263 = pneg %p262
      // Predicated region
      $region45: #{tpu_custom_call.1} parent=5 // pred_check
        _
      $region46: #{tpu_custom_call.1} parent=5 // pred_check_branch
        %265 = sbr.rel (%p262) target = $region48
      $region47: #{tpu_custom_call.1} parent=5 // pred_region
        %s266 = ssub.s32 %s16, 1
        %s267 = smul.u32 8, %s21
        %p268 = scmp.lt.s32.totalorder %s267, 15
        %s269 = scalar_select %p268, %s267, 15
        %s270 = smul.addr %s269, 4
        %s271 = scalar_lea.vmem %s0, %s270
        %p272 = pneg %p42
        %p273 = pneg %p39
        %p274 = scmp.lt.s32.totalorder %s21, 1
        %s275 = scalar_select %p274, %s21, 1
        %s276 = smul.addr %s275, 4
        %s277 = scalar_lea.vmem %s1, %s276
        %p278 = pneg %p68
        %p279 = pneg %p65
        %s280 = smul.u32 8, %s21
        %p281 = scmp.lt.s32.totalorder %s280, 15
        %s282 = scalar_select %p281, %s280, 15
        %s283 = smul.addr %s282, 8
        %s284 = scalar_lea.vmem %s2, %s283
        %p285 = pneg %p94
        %p286 = pneg %p91
        %p287 = pneg %p115
        %p288 = pneg %p112
        %p289 = pneg %p136
        %p290 = pneg %p133
        %p291 = pneg %p157
        %p292 = pneg %p154
        %p293 = pneg %p178
        %p294 = pneg %p175
        %p295 = pneg %p204
        %p296 = pneg %p201
        %s297 = sand.u32 %s191, 1
        %s298 = scalar_lea.sflag [#allocation3], %s297
        %s299 = sand.u32 %s191, 1
        %s300 = smul.addr %s299, 8
        %s301 = scalar_lea.vmem [#allocation2], %s300
        %s302 = smul.u32 8, %s21
        %p303 = scmp.lt.s32.totalorder %s302, 15
        %s304 = scalar_select %p303, %s302, 15
        %s305 = smul.addr %s304, 4
        %s306 = scalar_lea.vmem %s0, %s305
        %s307 = smul.u32 8, %s21
        %p308 = scmp.lt.s32.totalorder %s21, 1
        %s309 = scalar_select %p308, %s21, 1
        %s310 = smul.addr %s309, 4
        %s311 = scalar_lea.vmem %s1, %s310
        %s312 = smul.u32 8, %s21
        %p313 = scmp.lt.s32.totalorder %s312, 15
        %s314 = scalar_select %p313, %s312, 15
        %s315 = smul.addr %s314, 8
        %s316 = scalar_lea.vmem %s2, %s315
        %s317 = smul.u32 8, %s21
        %v319 = vld [vmem:[%s306] sm:$0xf]
        %v320 = vld [vmem:[%s306 + $0x4] sm:$0xf]
        %v321 = vld [vmem:[%s306 + $0x8] sm:$0xf]
        %v322 = vld [vmem:[%s306 + $0xc] sm:$0xf]
        %v323 = vld [vmem:[%s306 + $0x10] sm:$0xf]
        %v324 = vld [vmem:[%s306 + $0x14] sm:$0xf]
        %v325 = vld [vmem:[%s306 + $0x18] sm:$0xf]
        %v326 = vld [vmem:[%s306 + $0x1c] sm:$0xf]
        %v327 = vld [vmem:[%s311] sm:$0xf]
        %v328 = vld [vmem:[%s4] sm:$0xf]
        %v329 = vld [vmem:[%s4 + $0x4] sm:$0xf]
        %v330 = vld [vmem:[%s4 + $0x8] sm:$0xf]
        %v331 = vld [vmem:[%s4 + $0xc] sm:$0xf]
        %v332 = vld [vmem:[%s5] sm:$0x1]
        %v334 = vlaneseq
        %v335 = vshrl.u32 %v334, 7
        %v336 = vsub.s32 0, %v335
        %v337 = vrot.slane %v332, %v336
        %v343 = vunpack.c.l.b16 %v328
        %v344 = vunpack.c.l.b16 %v329
        %v345 = vunpack.c.l.b16 %v330
        %v346 = vunpack.c.l.b16 %v331
        %v347 = vpack.c.b16 %v344, %v343
        %v348 = vpack.c.b16 %v346, %v345
        %vm351 = vcmask 261120
        %v353 = vsel %vm351, %v327, 0
        %355 = vmatprep.subr.bf16.mxu0 0
        %356 = vmatpush1.bf16.msra.mxu0 %v347
        %357 = vmatprep.subr.bf16.mxu0 0
        %358 = vmatpush1.bf16.msra.mxu0 %v348
        %359 = vmatprep.subr.bf16.mxu0 0
        %360 = vmatpush1.bf16.msra.mxu0 0
        %361 = vmatprep.subr.bf16.mxu0 0
        %362 = vmatpush1.bf16.msra.mxu0 0
        %363 = vmatprep.subr.bf16.mxu0 0
        %364 = vmatpush1.bf16.msra.mxu0 0
        %365 = vmatprep.subr.bf16.mxu0 0
        %366 = vmatpush1.bf16.msra.mxu0 0
        %367 = vmatprep.subr.bf16.mxu0 0
        %368 = vmatpush1.bf16.msra.mxu0 0
        %369 = vmatprep.subr.bf16.mxu0 0
        %370 = vmatpush1.bf16.msra.mxu0 0
        %371 = vmatprep.subr.bf16.mxu0 0
        %372 = vmatpush1.bf16.msra.mxu0 0
        %373 = vmatprep.subr.bf16.mxu0 0
        %374 = vmatpush1.bf16.msra.mxu0 0
        %375 = vmatprep.subr.bf16.mxu0 0
        %376 = vmatpush1.bf16.msra.mxu0 0
        %377 = vmatprep.subr.bf16.mxu0 0
        %378 = vmatpush1.bf16.msra.mxu0 0
        %379 = vmatprep.subr.bf16.mxu0 0
        %380 = vmatpush1.bf16.msra.mxu0 0
        %381 = vmatprep.subr.bf16.mxu0 0
        %382 = vmatpush1.bf16.msra.mxu0 0
        %383 = vmatprep.subr.bf16.mxu0 0
        %384 = vmatpush1.bf16.msra.mxu0 0
        %385 = vmatprep.subr.bf16.mxu0 0
        %386 = vmatpush1.bf16.msra.mxu0 0
        %387 = vmatprep.mubr.bf16.mxu0 0
        %388 = vmatmul.mubr.bf16.gmra.mrb[0].mxu0 %v353
        %v389 = vpop.f32.mrb[0].mxu0
        %v390 = vadd.f32 %v337, %v389
        %v391 = vpop.f32.mrb[0].mxu0
        %v392 = vpop.f32.mrb[0].mxu0
        %v393 = vpop.f32.mrb[0].mxu0
        %394 = vdwg.mxu0
        %v395 = vld [vmem:[%s3] sm:$0xf]
        %v396 = vld [vmem:[%s3 + $0x4] sm:$0xf]
        %v397 = vld [vmem:[%s3 + $0x8] sm:$0xf]
        %v398 = vld [vmem:[%s3 + $0xc] sm:$0xf]
        %v407 = vunpack.c.l.b16 %v319
        %v408 = vunpack.c.l.b16 %v320
        %v409 = vunpack.c.l.b16 %v321
        %v410 = vunpack.c.l.b16 %v322
        %v411 = vunpack.c.l.b16 %v323
        %v412 = vunpack.c.l.b16 %v324
        %v413 = vunpack.c.l.b16 %v325
        %v414 = vunpack.c.l.b16 %v326
        %v415 = vpack.c.b16 %v408, %v407
        %v416 = vpack.c.b16 %v410, %v409
        %v417 = vpack.c.b16 %v412, %v411
        %v418 = vpack.c.b16 %v414, %v413
        %v423 = vunpack.c.l.b16 %v395
        %v424 = vunpack.c.l.b16 %v396
        %v425 = vunpack.c.l.b16 %v397
        %v426 = vunpack.c.l.b16 %v398
        %v427 = vpack.c.b16 %v424, %v423
        %v428 = vpack.c.b16 %v426, %v425
        %v432 = vsel %vm351, %v415, 0
        %v435 = vsel %vm351, %v416, 0
        %v438 = vsel %vm351, %v417, 0
        %v441 = vsel %vm351, %v418, 0
        %443 = vmatprep.subr.bf16.mxu0 0
        %444 = vmatpush1.bf16.msra.mxu0 %v427
        %445 = vmatprep.subr.bf16.mxu0 0
        %446 = vmatpush1.bf16.msra.mxu0 %v428
        %447 = vmatprep.subr.bf16.mxu0 0
        %448 = vmatpush1.bf16.msra.mxu0 0
        %449 = vmatprep.subr.bf16.mxu0 0
        %450 = vmatpush1.bf16.msra.mxu0 0
        %451 = vmatprep.subr.bf16.mxu0 0
        %452 = vmatpush1.bf16.msra.mxu0 0
        %453 = vmatprep.subr.bf16.mxu0 0
        %454 = vmatpush1.bf16.msra.mxu0 0
        %455 = vmatprep.subr.bf16.mxu0 0
        %456 = vmatpush1.bf16.msra.mxu0 0
        %457 = vmatprep.subr.bf16.mxu0 0
        %458 = vmatpush1.bf16.msra.mxu0 0
        %459 = vmatprep.subr.bf16.mxu0 0
        %460 = vmatpush1.bf16.msra.mxu0 0
        %461 = vmatprep.subr.bf16.mxu0 0
        %462 = vmatpush1.bf16.msra.mxu0 0
        %463 = vmatprep.subr.bf16.mxu0 0
        %464 = vmatpush1.bf16.msra.mxu0 0
        %465 = vmatprep.subr.bf16.mxu0 0
        %466 = vmatpush1.bf16.msra.mxu0 0
        %467 = vmatprep.subr.bf16.mxu0 0
        %468 = vmatpush1.bf16.msra.mxu0 0
        %469 = vmatprep.subr.bf16.mxu0 0
        %470 = vmatpush1.bf16.msra.mxu0 0
        %471 = vmatprep.subr.bf16.mxu0 0
        %472 = vmatpush1.bf16.msra.mxu0 0
        %473 = vmatprep.subr.bf16.mxu0 0
        %474 = vmatpush1.bf16.msra.mxu0 0
        %475 = vmatprep.mubr.bf16.mxu0 0
        %476 = vmatmul.mubr.bf16.gmra.mrb[0].mxu0 %v432
        %v477 = vpop.f32.mrb[0].mxu0
        %v478 = vadd.f32 0.0, %v477
        %v479 = vpop.f32.mrb[0].mxu0
        %v480 = vpop.f32.mrb[0].mxu0
        %v481 = vadd.f32 0.0, %v480
        %v482 = vpop.f32.mrb[0].mxu0
        %483 = vmatprep.mubr.bf16.mxu0 0
        %484 = vmatmul.mubr.bf16.gmra.mrb[0].mxu0 %v435
        %v485 = vpop.f32.mrb[0].mxu0
        %v486 = vadd.f32 0.0, %v485
        %v487 = vpop.f32.mrb[0].mxu0
        %v488 = vpop.f32.mrb[0].mxu0
        %v489 = vadd.f32 0.0, %v488
        %v490 = vpop.f32.mrb[0].mxu0
        %491 = vmatprep.mubr.bf16.mxu0 0
        %492 = vmatmul.mubr.bf16.gmra.mrb[0].mxu0 %v438
        %v493 = vpop.f32.mrb[0].mxu0
        %v494 = vadd.f32 0.0, %v493
        %v495 = vpop.f32.mrb[0].mxu0
        %v496 = vpop.f32.mrb[0].mxu0
        %v497 = vadd.f32 0.0, %v496
        %v498 = vpop.f32.mrb[0].mxu0
        %499 = vmatprep.mubr.bf16.mxu0 0
        %500 = vmatmul.mubr.bf16.gmra.mrb[0].mxu0 %v441
        %v501 = vpop.f32.mrb[0].mxu0
        %v502 = vadd.f32 0.0, %v501
        %v503 = vpop.f32.mrb[0].mxu0
        %v504 = vpop.f32.mrb[0].mxu0
        %v505 = vadd.f32 0.0, %v504
        %v506 = vpop.f32.mrb[0].mxu0
        %507 = vdwg.mxu0
        %v509 = vcombine.high %v390, %v390
        %v511 = vunpack.c.l.s4 1966171168
        %v512 = vunpack.c.0.s8 %v511
        %v513 = vlaneseq
        %v514 = vshrl.u32 %v513, 7
        %v515 = vsub.s32 %v512, %v514
        %v516 = vrot.slane %v390, %v515
        %v518 = vunpack.c.l.s4 1966171168
        %v519 = vunpack.c.0.s8 %v518
        %v520 = vlaneseq
        %v521 = vshrl.u32 %v520, 7
        %v522 = vsub.s32 %v519, %v521
        %v523 = vrot.slane %v509, %v522
        %v524 = vcombine.high %v516, %v516
        %v525 = vcombine.high %v523, %v523
        %v527 = vunpack.c.l.s4 1966171168
        %v528 = vunpack.c.0.s8 %v527
        %v529 = vlaneseq
        %v530 = vshrl.u32 %v529, 7
        %v531 = vsub.s32 %v528, %v530
        %v532 = vrot.slane %v516, %v531
        %v534 = vunpack.c.l.s4 1966171168
        %v535 = vunpack.c.0.s8 %v534
        %v536 = vlaneseq
        %v537 = vshrl.u32 %v536, 7
        %v538 = vsub.s32 %v535, %v537
        %v539 = vrot.slane %v523, %v538
        %v541 = vunpack.c.l.s4 1966171168
        %v542 = vunpack.c.0.s8 %v541
        %v543 = vlaneseq
        %v544 = vshrl.u32 %v543, 7
        %v545 = vsub.s32 %v542, %v544
        %v546 = vrot.slane %v524, %v545
        %v548 = vunpack.c.l.s4 1966171168
        %v549 = vunpack.c.0.s8 %v548
        %v550 = vlaneseq
        %v551 = vshrl.u32 %v550, 7
        %v552 = vsub.s32 %v549, %v551
        %v553 = vrot.slane %v525, %v552
        %v554 = vcombine.high %v532, %v532
        %v555 = vcombine.high %v539, %v539
        %v556 = vcombine.high %v546, %v546
        %v557 = vcombine.high %v553, %v553
        %v558 = vlaneseq
        %v559 = vshrl.u32 %v558, 7
        %v560 = vsub.s32 0, %v559
        %v561 = vrot.slane %v532, %v560
        %v562 = vlaneseq
        %v563 = vshrl.u32 %v562, 7
        %v564 = vsub.s32 0, %v563
        %v565 = vrot.slane %v546, %v564
        %v566 = vlaneseq
        %v567 = vshrl.u32 %v566, 7
        %v568 = vsub.s32 0, %v567
        %v569 = vrot.slane %v554, %v568
        %v570 = vlaneseq
        %v571 = vshrl.u32 %v570, 7
        %v572 = vsub.s32 0, %v571
        %v573 = vrot.slane %v556, %v572
        %v574 = vlaneseq
        %v575 = vshrl.u32 %v574, 7
        %v576 = vsub.s32 0, %v575
        %v577 = vrot.slane %v539, %v576
        %v578 = vlaneseq
        %v579 = vshrl.u32 %v578, 7
        %v580 = vsub.s32 0, %v579
        %v581 = vrot.slane %v553, %v580
        %v582 = vlaneseq
        %v583 = vshrl.u32 %v582, 7
        %v584 = vsub.s32 0, %v583
        %v585 = vrot.slane %v555, %v584
        %v586 = vlaneseq
        %v587 = vshrl.u32 %v586, 7
        %v588 = vsub.s32 0, %v587
        %v589 = vrot.slane %v557, %v588
        %v598 = vadd.f32 %v478, %v561
        %v599 = vadd.f32 %v481, %v565
        %v600 = vadd.f32 %v486, %v569
        %v601 = vadd.f32 %v489, %v573
        %v602 = vadd.f32 %v494, %v577
        %v603 = vadd.f32 %v497, %v581
        %v604 = vadd.f32 %v502, %v585
        %v605 = vadd.f32 %v505, %v589
        %v606 = vmax.f32 %v598, 0.0
        %v607 = vmax.f32 %v599, 0.0
        %v608 = vmax.f32 %v600, 0.0
        %v609 = vmax.f32 %v601, 0.0
        %v610 = vmax.f32 %v602, 0.0
        %v611 = vmax.f32 %v603, 0.0
        %v612 = vmax.f32 %v604, 0.0
        %v613 = vmax.f32 %v605, 0.0
        %v614 = vld [vmem:[%s6] sm:$0x1]
        %v616 = vlaneseq
        %v617 = vshrl.u32 %v616, 7
        %v618 = vsub.s32 0, %v617
        %v619 = vrot.slane %v614, %v618
        %v621 = vmul.f32 %v606, %v619
        %v622 = vmul.f32 %v607, %v619
        %v623 = vmul.f32 %v608, %v619
        %v624 = vmul.f32 %v609, %v619
        %v625 = vmul.f32 %v610, %v619
        %v626 = vmul.f32 %v611, %v619
        %v627 = vmul.f32 %v612, %v619
        %v628 = vmul.f32 %v613, %v619
        %v629 = vsel %vm351, %v621, 0.0
        %630 = vadd.xlane.f32.xlu0 %v629
        %v631 = vpop.xlane.xlu0 %630
        %v632 = vsel %vm351, %v622, 0.0
        %633 = vadd.xlane.f32.xlu0 %v632
        %v634 = vpop.xlane.xlu0 %633
        %v635 = vsel %vm351, %v623, 0.0
        %636 = vadd.xlane.f32.xlu0 %v635
        %v637 = vpop.xlane.xlu0 %636
        %v638 = vsel %vm351, %v624, 0.0
        %639 = vadd.xlane.f32.xlu0 %v638
        %v640 = vpop.xlane.xlu0 %639
        %v641 = vsel %vm351, %v625, 0.0
        %642 = vadd.xlane.f32.xlu0 %v641
        %v643 = vpop.xlane.xlu0 %642
        %v644 = vsel %vm351, %v626, 0.0
        %645 = vadd.xlane.f32.xlu0 %v644
        %v646 = vpop.xlane.xlu0 %645
        %v647 = vsel %vm351, %v627, 0.0
        %648 = vadd.xlane.f32.xlu0 %v647
        %v649 = vpop.xlane.xlu0 %648
        %v650 = vsel %vm351, %v628, 0.0
        %651 = vadd.xlane.f32.xlu0 %v650
        %v652 = vpop.xlane.xlu0 %651
        %v653 = vld [vmem:[%s316] sm:$0xff]
        %v654 = vld [vmem:[%s316 + $0x8] sm:$0xff]
        %v655 = vld [vmem:[%s316 + $0x10] sm:$0xff]
        %v656 = vld [vmem:[%s316 + $0x18] sm:$0xff]
        %v657 = vld [vmem:[%s316 + $0x20] sm:$0xff]
        %v658 = vld [vmem:[%s316 + $0x28] sm:$0xff]
        %v659 = vld [vmem:[%s316 + $0x30] sm:$0xff]
        %v660 = vld [vmem:[%s316 + $0x38] sm:$0xff]
        %v661 = vadd.f32 %v631, %v653
        %v662 = vadd.f32 %v634, %v654
        %v663 = vadd.f32 %v637, %v655
        %v664 = vadd.f32 %v640, %v656
        %v665 = vadd.f32 %v643, %v657
        %v666 = vadd.f32 %v646, %v658
        %v667 = vadd.f32 %v649, %v659
        %v668 = vadd.f32 %v652, %v660
        %vm669 = vcmask 7168
        %v670 = vsel %vm669, %v661, -inf
        %v671 = vrot.slane %v670, 4
        %v672 = vmax.f32 %v670, %v671
        %v673 = vrot.slane %v672, 2
        %v674 = vmax.f32 %v672, %v673
        %v675 = vrot.slane %v674, 1
        %v676 = vmax.f32 %v674, %v675
        %v677 = vsel %vm669, %v662, -inf
        %v678 = vrot.slane %v677, 4
        %v679 = vmax.f32 %v677, %v678
        %v680 = vrot.slane %v679, 2
        %v681 = vmax.f32 %v679, %v680
        %v682 = vrot.slane %v681, 1
        %v683 = vmax.f32 %v681, %v682
        %v684 = vsel %vm669, %v663, -inf
        %v685 = vrot.slane %v684, 4
        %v686 = vmax.f32 %v684, %v685
        %v687 = vrot.slane %v686, 2
        %v688 = vmax.f32 %v686, %v687
        %v689 = vrot.slane %v688, 1
        %v690 = vmax.f32 %v688, %v689
        %v691 = vsel %vm669, %v664, -inf
        %v692 = vrot.slane %v691, 4
        %v693 = vmax.f32 %v691, %v692
        %v694 = vrot.slane %v693, 2
        %v695 = vmax.f32 %v693, %v694
        %v696 = vrot.slane %v695, 1
        %v697 = vmax.f32 %v695, %v696
        %v698 = vsel %vm669, %v665, -inf
        %v699 = vrot.slane %v698, 4
        %v700 = vmax.f32 %v698, %v699
        %v701 = vrot.slane %v700, 2
        %v702 = vmax.f32 %v700, %v701
        %v703 = vrot.slane %v702, 1
        %v704 = vmax.f32 %v702, %v703
        %v705 = vsel %vm669, %v666, -inf
        %v706 = vrot.slane %v705, 4
        %v707 = vmax.f32 %v705, %v706
        %v708 = vrot.slane %v707, 2
        %v709 = vmax.f32 %v707, %v708
        %v710 = vrot.slane %v709, 1
        %v711 = vmax.f32 %v709, %v710
        %v712 = vsel %vm669, %v667, -inf
        %v713 = vrot.slane %v712, 4
        %v714 = vmax.f32 %v712, %v713
        %v715 = vrot.slane %v714, 2
        %v716 = vmax.f32 %v714, %v715
        %v717 = vrot.slane %v716, 1
        %v718 = vmax.f32 %v716, %v717
        %v719 = vsel %vm669, %v668, -inf
        %v720 = vrot.slane %v719, 4
        %v721 = vmax.f32 %v719, %v720
        %v722 = vrot.slane %v721, 2
        %v723 = vmax.f32 %v721, %v722
        %v724 = vrot.slane %v723, 1
        %v725 = vmax.f32 %v723, %v724
        %v726 = vsub.f32 %v661, %v676
        %v727 = vsub.f32 %v662, %v683
        %v728 = vsub.f32 %v663, %v690
        %v729 = vsub.f32 %v664, %v697
        %v730 = vsub.f32 %v665, %v704
        %v731 = vsub.f32 %v666, %v711
        %v732 = vsub.f32 %v667, %v718
        %v733 = vsub.f32 %v668, %v725
        %v734 = vmul.f32 %v726, 1.442695
        %v735 = vpow.pop %v734
        %v736 = vmul.f32 %v727, 1.442695
        %v737 = vpow.pop %v736
        %v738 = vmul.f32 %v728, 1.442695
        %v739 = vpow.pop %v738
        %v740 = vmul.f32 %v729, 1.442695
        %v741 = vpow.pop %v740
        %v742 = vmul.f32 %v730, 1.442695
        %v743 = vpow.pop %v742
        %v744 = vmul.f32 %v731, 1.442695
        %v745 = vpow.pop %v744
        %v746 = vmul.f32 %v732, 1.442695
        %v747 = vpow.pop %v746
        %v748 = vmul.f32 %v733, 1.442695
        %v749 = vpow.pop %v748
        %v750 = vsel %vm669, %v735, 0.0
        %v751 = vrot.slane %v750, 4
        %v752 = vadd.f32 %v750, %v751
        %v753 = vrot.slane %v752, 2
        %v754 = vadd.f32 %v752, %v753
        %v755 = vrot.slane %v754, 1
        %v756 = vadd.f32 %v754, %v755
        %v757 = vsel %vm669, %v737, 0.0
        %v758 = vrot.slane %v757, 4
        %v759 = vadd.f32 %v757, %v758
        %v760 = vrot.slane %v759, 2
        %v761 = vadd.f32 %v759, %v760
        %v762 = vrot.slane %v761, 1
        %v763 = vadd.f32 %v761, %v762
        %v764 = vsel %vm669, %v739, 0.0
        %v765 = vrot.slane %v764, 4
        %v766 = vadd.f32 %v764, %v765
        %v767 = vrot.slane %v766, 2
        %v768 = vadd.f32 %v766, %v767
        %v769 = vrot.slane %v768, 1
        %v770 = vadd.f32 %v768, %v769
        %v771 = vsel %vm669, %v741, 0.0
        %v772 = vrot.slane %v771, 4
        %v773 = vadd.f32 %v771, %v772
        %v774 = vrot.slane %v773, 2
        %v775 = vadd.f32 %v773, %v774
        %v776 = vrot.slane %v775, 1
        %v777 = vadd.f32 %v775, %v776
        %v778 = vsel %vm669, %v743, 0.0
        %v779 = vrot.slane %v778, 4
        %v780 = vadd.f32 %v778, %v779
        %v781 = vrot.slane %v780, 2
        %v782 = vadd.f32 %v780, %v781
        %v783 = vrot.slane %v782, 1
        %v784 = vadd.f32 %v782, %v783
        %v785 = vsel %vm669, %v745, 0.0
        %v786 = vrot.slane %v785, 4
        %v787 = vadd.f32 %v785, %v786
        %v788 = vrot.slane %v787, 2
        %v789 = vadd.f32 %v787, %v788
        %v790 = vrot.slane %v789, 1
        %v791 = vadd.f32 %v789, %v790
        %v792 = vsel %vm669, %v747, 0.0
        %v793 = vrot.slane %v792, 4
        %v794 = vadd.f32 %v792, %v793
        %v795 = vrot.slane %v794, 2
        %v796 = vadd.f32 %v794, %v795
        %v797 = vrot.slane %v796, 1
        %v798 = vadd.f32 %v796, %v797
        %v799 = vsel %vm669, %v749, 0.0
        %v800 = vrot.slane %v799, 4
        %v801 = vadd.f32 %v799, %v800
        %v802 = vrot.slane %v801, 2
        %v803 = vadd.f32 %v801, %v802
        %v804 = vrot.slane %v803, 1
        %v805 = vadd.f32 %v803, %v804
        %v806 = vunpack.c.l.bf16 %v319
        %v807 = vunpack.c.l.bf16 %v320
        %v808 = vunpack.c.l.bf16 %v321
        %v809 = vunpack.c.l.bf16 %v322
        %v810 = vunpack.c.l.bf16 %v323
        %v811 = vunpack.c.l.bf16 %v324
        %v812 = vunpack.c.l.bf16 %v325
        %v813 = vunpack.c.l.bf16 %v326
        %815 = vset.pattern.permute.xlu0 0
        %816 = vperm.xlu0 %815, %v735
        %v817 = vpop.permute.xlu0 %816
        %820 = vset.pattern.permute.xlu0 0
        %821 = vperm.xlu0 %820, %v737
        %v822 = vpop.permute.xlu0 %821
        %825 = vset.pattern.permute.xlu0 0
        %826 = vperm.xlu0 %825, %v739
        %v827 = vpop.permute.xlu0 %826
        %830 = vset.pattern.permute.xlu0 0
        %831 = vperm.xlu0 %830, %v741
        %v832 = vpop.permute.xlu0 %831
        %835 = vset.pattern.permute.xlu0 0
        %836 = vperm.xlu0 %835, %v743
        %v837 = vpop.permute.xlu0 %836
        %840 = vset.pattern.permute.xlu0 0
        %841 = vperm.xlu0 %840, %v745
        %v842 = vpop.permute.xlu0 %841
        %845 = vset.pattern.permute.xlu0 0
        %846 = vperm.xlu0 %845, %v747
        %v847 = vpop.permute.xlu0 %846
        %850 = vset.pattern.permute.xlu0 0
        %851 = vperm.xlu0 %850, %v749
        %v852 = vpop.permute.xlu0 %851
        %v854 = vmul.f32 %v817, %v806
        %v855 = vmul.f32 %v822, %v807
        %v856 = vmul.f32 %v827, %v808
        %v857 = vmul.f32 %v832, %v809
        %v858 = vmul.f32 %v837, %v810
        %v859 = vmul.f32 %v842, %v811
        %v860 = vmul.f32 %v847, %v812
        %v861 = vmul.f32 %v852, %v813
        %v862 = vsel %vm351, %v854, 0.0
        %v863 = vrot.slane %v862, 4
        %v864 = vadd.f32 %v862, %v863
        %v865 = vrot.slane %v864, 2
        %v866 = vadd.f32 %v864, %v865
        %v867 = vrot.slane %v866, 1
        %v868 = vadd.f32 %v866, %v867
        %v869 = vsel %vm351, %v855, 0.0
        %v870 = vrot.slane %v869, 4
        %v871 = vadd.f32 %v869, %v870
        %v872 = vrot.slane %v871, 2
        %v873 = vadd.f32 %v871, %v872
        %v874 = vrot.slane %v873, 1
        %v875 = vadd.f32 %v873, %v874
        %v876 = vsel %vm351, %v856, 0.0
        %v877 = vrot.slane %v876, 4
        %v878 = vadd.f32 %v876, %v877
        %v879 = vrot.slane %v878, 2
        %v880 = vadd.f32 %v878, %v879
        %v881 = vrot.slane %v880, 1
        %v882 = vadd.f32 %v880, %v881
        %v883 = vsel %vm351, %v857, 0.0
        %v884 = vrot.slane %v883, 4
        %v885 = vadd.f32 %v883, %v884
        %v886 = vrot.slane %v885, 2
        %v887 = vadd.f32 %v885, %v886
        %v888 = vrot.slane %v887, 1
        %v889 = vadd.f32 %v887, %v888
        %v890 = vsel %vm351, %v858, 0.0
        %v891 = vrot.slane %v890, 4
        %v892 = vadd.f32 %v890, %v891
        %v893 = vrot.slane %v892, 2
        %v894 = vadd.f32 %v892, %v893
        %v895 = vrot.slane %v894, 1
        %v896 = vadd.f32 %v894, %v895
        %v897 = vsel %vm351, %v859, 0.0
        %v898 = vrot.slane %v897, 4
        %v899 = vadd.f32 %v897, %v898
        %v900 = vrot.slane %v899, 2
        %v901 = vadd.f32 %v899, %v900
        %v902 = vrot.slane %v901, 1
        %v903 = vadd.f32 %v901, %v902
        %v904 = vsel %vm351, %v860, 0.0
        %v905 = vrot.slane %v904, 4
        %v906 = vadd.f32 %v904, %v905
        %v907 = vrot.slane %v906, 2
        %v908 = vadd.f32 %v906, %v907
        %v909 = vrot.slane %v908, 1
        %v910 = vadd.f32 %v908, %v909
        %v911 = vsel %vm351, %v861, 0.0
        %v912 = vrot.slane %v911, 4
        %v913 = vadd.f32 %v911, %v912
        %v914 = vrot.slane %v913, 2
        %v915 = vadd.f32 %v913, %v914
        %v916 = vrot.slane %v915, 1
        %v917 = vadd.f32 %v915, %v916
        %v918 = vrcp.pop %v756
        %v919 = vrcp.pop %v763
        %v920 = vrcp.pop %v770
        %v921 = vrcp.pop %v777
        %v922 = vrcp.pop %v784
        %v923 = vrcp.pop %v791
        %v924 = vrcp.pop %v798
        %v925 = vrcp.pop %v805
        %927 = vset.pattern.permute.xlu0 0
        %928 = vperm.xlu0 %927, %v918
        %v929 = vpop.permute.xlu0 %928
        %932 = vset.pattern.permute.xlu0 0
        %933 = vperm.xlu0 %932, %v919
        %v934 = vpop.permute.xlu0 %933
        %937 = vset.pattern.permute.xlu0 0
        %938 = vperm.xlu0 %937, %v920
        %v939 = vpop.permute.xlu0 %938
        %942 = vset.pattern.permute.xlu0 0
        %943 = vperm.xlu0 %942, %v921
        %v944 = vpop.permute.xlu0 %943
        %947 = vset.pattern.permute.xlu0 0
        %948 = vperm.xlu0 %947, %v922
        %v949 = vpop.permute.xlu0 %948
        %952 = vset.pattern.permute.xlu0 0
        %953 = vperm.xlu0 %952, %v923
        %v954 = vpop.permute.xlu0 %953
        %957 = vset.pattern.permute.xlu0 0
        %958 = vperm.xlu0 %957, %v924
        %v959 = vpop.permute.xlu0 %958
        %962 = vset.pattern.permute.xlu0 0
        %963 = vperm.xlu0 %962, %v925
        %v964 = vpop.permute.xlu0 %963
        %v966 = vmul.f32 %v868, %v929
        %v967 = vmul.f32 %v875, %v934
        %v968 = vmul.f32 %v882, %v939
        %v969 = vmul.f32 %v889, %v944
        %v970 = vmul.f32 %v896, %v949
        %v971 = vmul.f32 %v903, %v954
        %v972 = vmul.f32 %v910, %v959
        %v973 = vmul.f32 %v917, %v964
        %vm982 = vcmask 1041409
        %v983 = vsel %vm982, %v967, %v966
        %vm984 = vcmask 1042434
        %v985 = vsel %vm984, %v968, %v983
        %vm986 = vcmask 1043459
        %v987 = vsel %vm986, %v969, %v985
        %vm988 = vcmask 1044484
        %v989 = vsel %vm988, %v970, %v987
        %vm990 = vcmask 1045509
        %v991 = vsel %vm990, %v971, %v989
        %vm992 = vcmask 1046534
        %v993 = vsel %vm992, %v972, %v991
        %vm994 = vcmask 1047559
        %v995 = vsel %vm994, %v973, %v993
        %997 = vst.msk [vmem:[%s301] sm:$0xff] %vm351, %v995
        %s998 = sand.u32 %s191, 1
        %s999 = scalar_lea.sflag [#allocation3], %s998
        %s1000 = sand.u32 %s191, 1
        %s1001 = smul.addr %s1000, 8
        %s1002 = scalar_lea.vmem [#allocation2], %s1001
        // Predicated region
        $region49: #{tpu_custom_call.1} parent=47 // pred_check
          %p1003 = pneg %p201
        $region50: #{tpu_custom_call.1} parent=47 // pred_check_branch
          %1005 = sbr.rel (%p1003) target = $region52
        $region51: #{tpu_custom_call.1} parent=47 // pred_region
          %s1007 = ssub.s32 128, 128
          %1008 = vsyncadd %s999, %s1007
          %s1009 = smul.addr %s21, 128
          %s1010 = scalar_lea.hbm %s7, %s1009
          %s1012 = sshll.u32 %s1002, 4
          %s1013 = int_to_ptr.vmem [resolvable:$true] %s1012
          %1015 = dma.vmem_to_hbm [thread:$0]  %s1013, 128, %s1010, %s999
        $region52: #{tpu_custom_call.1} parent=47 // pred_fallthru
          _
      $region48: #{tpu_custom_call.1} parent=5 // pred_fallthru
        _
      %p1016 = scmp.le.s32.totalorder 2, %s16
      // Predicated region
      $region53: #{tpu_custom_call.1} parent=5 // pred_check
        %p1017 = pneg %p1016
      $region54: #{tpu_custom_call.1} parent=5 // pred_check_branch
        %1019 = sbr.rel (%p1017) target = $region56
      $region55: #{tpu_custom_call.1} parent=5 // pred_region
        %s1020 = ssub.s32 %s16, 2
        // Predicated region
        $region57: #{tpu_custom_call.1} parent=55 // pred_check
          %p1021 = pneg %p207
        $region58: #{tpu_custom_call.1} parent=55 // pred_check_branch
          %1023 = sbr.rel (%p1021) target = $region60
        $region59: #{tpu_custom_call.1} parent=55 // pred_region
          %s1024 = sand.u32 %s192, 1
          %s1025 = scalar_lea.sflag [#allocation3], %s1024
          %s1026 = sand.u32 %s192, 1
          %s1027 = smul.addr %s1026, 8
          %s1028 = scalar_lea.vmem [#allocation2], %s1027
          %1029 = dma.done %s1025, 128
        $region60: #{tpu_custom_call.1} parent=55 // pred_fallthru
          _
      $region56: #{tpu_custom_call.1} parent=5 // pred_fallthru
        _
    $region6: #{tpu_custom_call.1} parent=1 // loop_footer
      %s20 = sadd.s32 1, %s16
    $region7: #{tpu_custom_call.1} parent=1 // loop_footer_branch
      %15 = sbr.rel target = $region3
    $region8: #{tpu_custom_call.1} parent=1 // loop_exit
      _
    %1030 = vsyncpa [#allocation3], 1
    %s1031 = scalar_lea.sflag [#allocation3], 1
    %1032 = vsyncpa %s1031, 1

// kernel: tpu_custom_call.1
$region0: #{tpu_custom_call.1}
  #allocation0 [shape = 'u32[]', space=smem, size = 0x4, offset = 0x4, fixed_abs, tag = 'smem constant byte address 0x4 - core index']
  #allocation1 [shape = 'u32[144,128]{1,0:T(1,128)}', space=vmem, size = 0x12000, scoped, tag = 'internal scratch']
  %s0 = inlined_call_operand.vmem [shape: bf16[16,8,32], index: 0, kind: input, shape index: {}]
  %s1 = inlined_call_operand.vmem [shape: bf16[16,32], index: 1, kind: input, shape index: {}]
  %s2 = inlined_call_operand.vmem [shape: f32[16,8,1], index: 2, kind: input, shape index: {}]
  %s3 = inlined_call_operand.vmem [shape: bf16[32,32], index: 3, kind: input, shape index: {}]
  %s4 = inlined_call_operand.vmem [shape: bf16[32,32], index: 4, kind: input, shape index: {}]
  %s5 = inlined_call_operand.vmem [shape: f32[1,32], index: 5, kind: input, shape index: {}]
  %s6 = inlined_call_operand.vmem [shape: f32[1,32], index: 6, kind: input, shape index: {}]
  %s7 = inlined_call_operand.hbm [shape: f32[16,32], index: 7, kind: output, shape index: {}]
  %s8 = sld [smem:[#allocation0]]
  $region61: #{tpu_custom_call.1} parent=0
    _
  %s10 = ssub.s32 1, %s8
  %s11 = scalar_select 0, %s10, %s8
  $region1: #{tpu_custom_call.1} parent=0
    #allocation2 [shape = 'u8[8192]{0}', space=vmem, size = 0x2000, scoped, tag = 'output window, operand 0']
    #allocation3 [shape = 's32[2]{0}', space=sflag, size = 0x8, scoped, tag = 'scoped memory for tpu_custom_call.1']
    %12 = vsyncpa [#allocation3], 0
    %s13 = scalar_lea.sflag [#allocation3], 1
    %14 = vsyncpa %s13, 0
    loop: start=0, step=1, limit=4
    $region2: #{tpu_custom_call.1} parent=1 // loop_pre_header
      _
    $region3: #{tpu_custom_call.1} parent=1 // loop_header
      %s16 = sphi 0, %s20
      %p17 = scmp.ge.s32.totalorder %s16, 4
      %s26 = sphi 0, %s28
      %s29 = sphi 0, %s26
      %s30 = sphi 0, %s29
      %s46 = sphi 0, %s30
      %s52 = sphi 0, %s54
      %s55 = sphi 0, %s52
      %s56 = sphi 0, %s55
      %s72 = sphi 0, %s56
      %s78 = sphi 0, %s80
      %s81 = sphi 0, %s78
      %s82 = sphi 0, %s81
      %s98 = sphi 0, %s82
      %s102 = sphi 0, %s102
      %s104 = sphi 0, %s102
      %s105 = sphi 0, %s104
      %s119 = sphi 0, %s105
      %s123 = sphi 0, %s123
      %s125 = sphi 0, %s123
      %s126 = sphi 0, %s125
      %s140 = sphi 0, %s126
      %s144 = sphi 0, %s144
      %s146 = sphi 0, %s144
      %s147 = sphi 0, %s146
      %s161 = sphi 0, %s147
      %s165 = sphi 0, %s165
      %s167 = sphi 0, %s165
      %s168 = sphi 0, %s167
      %s182 = sphi 0, %s168
      %s188 = sphi 0, %s190
      %s191 = sphi 0, %s188
      %s192 = sphi 0, %s191
      %s208 = sphi 0, %s192
    $region4: #{tpu_custom_call.1} parent=1 // loop_header_branch
      %19 = sbr.rel (%p17) target = $region8
    $region5: #{tpu_custom_call.1} parent=1 // loop_body
      %s21 = ssub.s32 %s16, 1
      %s22 = ssub.s32 %s16, 2
      %s23 = sadd.s32 %s16, 1
      %s24 = ssub.s32 %s16, %s23
      %p25 = scmp.eq.s32.totalorder %s24, 0
      %s27 = sadd.s32 %s26, 1
      %s28 = scalar_select %p25, %s26, %s27
      %p31 = pneg %p25
      %p32 = scmp.eq.s32.totalorder %s16, 1
      %p33 = por %p31, %p32
      %p34 = scmp.ne.s32.totalorder %s26, %s29
      %p35 = scmp.eq.s32.totalorder %s16, 0
      %p36 = por %p34, %p35
      %p37 = scmp.ne.s32.totalorder %s26, %s29
      %p38 = scmp.eq.s32.totalorder %s21, 1
      %p39 = por %p37, %p38
      %p40 = scmp.ne.s32.totalorder %s29, %s30
      %p41 = scmp.eq.s32.totalorder %s21, 0
      %p42 = por %p40, %p41
      %p43 = scmp.ne.s32.totalorder %s29, %s30
      %p44 = scmp.eq.s32.totalorder %s22, 1
      %p45 = por %p43, %p44
      %p47 = scmp.ne.s32.totalorder %s30, %s46
      %p48 = scmp.eq.s32.totalorder %s22, 0
      %p49 = por %p47, %p48
      %s50 = ssub.s32 %s16, %s23
      %p51 = scmp.eq.s32.totalorder %s50, 0
      %s53 = sadd.s32 %s52, 1
      %s54 = scalar_select %p51, %s52, %s53
      %p57 = pneg %p51
      %p58 = scmp.eq.s32.totalorder %s16, 1
      %p59 = por %p57, %p58
      %p60 = scmp.ne.s32.totalorder %s52, %s55
      %p61 = scmp.eq.s32.totalorder %s16, 0
      %p62 = por %p60, %p61
      %p63 = scmp.ne.s32.totalorder %s52, %s55
      %p64 = scmp.eq.s32.totalorder %s21, 1
      %p65 = por %p63, %p64
      %p66 = scmp.ne.s32.totalorder %s55, %s56
      %p67 = scmp.eq.s32.totalorder %s21, 0
      %p68 = por %p66, %p67
      %p69 = scmp.ne.s32.totalorder %s55, %s56
      %p70 = scmp.eq.s32.totalorder %s22, 1
      %p71 = por %p69, %p70
      %p73 = scmp.ne.s32.totalorder %s56, %s72
      %p74 = scmp.eq.s32.totalorder %s22, 0
      %p75 = por %p73, %p74
      %s76 = ssub.s32 %s16, %s23
      %p77 = scmp.eq.s32.totalorder %s76, 0
      %s79 = sadd.s32 %s78, 1
      %s80 = scalar_select %p77, %s78, %s79
      %p83 = pneg %p77
      %p84 = scmp.eq.s32.totalorder %s16, 1
      %p85 = por %p83, %p84
      %p86 = scmp.ne.s32.totalorder %s78, %s81
      %p87 = scmp.eq.s32.totalorder %s16, 0
      %p88 = por %p86, %p87
      %p89 = scmp.ne.s32.totalorder %s78, %s81
      %p90 = scmp.eq.s32.totalorder %s21, 1
      %p91 = por %p89, %p90
      %p92 = scmp.ne.s32.totalorder %s81, %s82
      %p93 = scmp.eq.s32.totalorder %s21, 0
      %p94 = por %p92, %p93
      %p95 = scmp.ne.s32.totalorder %s81, %s82
      %p96 = scmp.eq.s32.totalorder %s22, 1
      %p97 = por %p95, %p96
      %p99 = scmp.ne.s32.totalorder %s82, %s98
      %p100 = scmp.eq.s32.totalorder %s22, 0
      %p101 = por %p99, %p100
      %s103 = sadd.s32 %s102, 1
      %p106 = scmp.eq.s32.totalorder %s16, 1
      %p107 = scmp.ne.s32.totalorder %s102, %s104
      %p108 = scmp.eq.s32.totalorder %s16, 0
      %p109 = por %p107, %p108
      %p110 = scmp.ne.s32.totalorder %s102, %s104
      %p111 = scmp.eq.s32.totalorder %s21, 1
      %p112 = por %p110, %p111
      %p113 = scmp.ne.s32.totalorder %s104, %s105
      %p114 = scmp.eq.s32.totalorder %s21, 0
      %p115 = por %p113, %p114
      %p116 = scmp.ne.s32.totalorder %s104, %s105
      %p117 = scmp.eq.s32.totalorder %s22, 1
      %p118 = por %p116, %p117
      %p120 = scmp.ne.s32.totalorder %s105, %s119
      %p121 = scmp.eq.s32.totalorder %s22, 0
      %p122 = por %p120, %p121
      %s124 = sadd.s32 %s123, 1
      %p127 = scmp.eq.s32.totalorder %s16, 1
      %p128 = scmp.ne.s32.totalorder %s123, %s125
      %p129 = scmp.eq.s32.totalorder %s16, 0
      %p130 = por %p128, %p129
      %p131 = scmp.ne.s32.totalorder %s123, %s125
      %p132 = scmp.eq.s32.totalorder %s21, 1
      %p133 = por %p131, %p132
      %p134 = scmp.ne.s32.totalorder %s125, %s126
      %p135 = scmp.eq.s32.totalorder %s21, 0
      %p136 = por %p134, %p135
      %p137 = scmp.ne.s32.totalorder %s125, %s126
      %p138 = scmp.eq.s32.totalorder %s22, 1
      %p139 = por %p137, %p138
      %p141 = scmp.ne.s32.totalorder %s126, %s140
      %p142 = scmp.eq.s32.totalorder %s22, 0
      %p143 = por %p141, %p142
      %s145 = sadd.s32 %s144, 1
      %p148 = scmp.eq.s32.totalorder %s16, 1
      %p149 = scmp.ne.s32.totalorder %s144, %s146
      %p150 = scmp.eq.s32.totalorder %s16, 0
      %p151 = por %p149, %p150
      %p152 = scmp.ne.s32.totalorder %s144, %s146
      %p153 = scmp.eq.s32.totalorder %s21, 1
      %p154 = por %p152, %p153
      %p155 = scmp.ne.s32.totalorder %s146, %s147
      %p156 = scmp.eq.s32.totalorder %s21, 0
      %p157 = por %p155, %p156
      %p158 = scmp.ne.s32.totalorder %s146, %s147
      %p159 = scmp.eq.s32.totalorder %s22, 1
      %p160 = por %p158, %p159
      %p162 = scmp.ne.s32.totalorder %s147, %s161
      %p163 = scmp.eq.s32.totalorder %s22, 0
      %p164 = por %p162, %p163
      %s166 = sadd.s32 %s165, 1
      %p169 = scmp.eq.s32.totalorder %s16, 1
      %p170 = scmp.ne.s32.totalorder %s165, %s167
      %p171 = scmp.eq.s32.totalorder %s16, 0
      %p172 = por %p170, %p171
      %p173 = scmp.ne.s32.totalorder %s165, %s167
      %p174 = scmp.eq.s32.totalorder %s21, 1
      %p175 = por %p173, %p174
      %p176 = scmp.ne.s32.totalorder %s167, %s168
      %p177 = scmp.eq.s32.totalorder %s21, 0
      %p178 = por %p176, %p177
      %p179 = scmp.ne.s32.totalorder %s167, %s168
      %p180 = scmp.eq.s32.totalorder %s22, 1
      %p181 = por %p179, %p180
      %p183 = scmp.ne.s32.totalorder %s168, %s182
      %p184 = scmp.eq.s32.totalorder %s22, 0
      %p185 = por %p183, %p184
      %s186 = ssub.s32 %s16, %s23
      %p187 = scmp.eq.s32.totalorder %s186, 0
      %s189 = sadd.s32 %s188, 1
      %s190 = scalar_select %p187, %s188, %s189
      %p193 = pneg %p187
      %p194 = scmp.eq.s32.totalorder %s16, 1
      %p195 = por %p193, %p194
      %p196 = scmp.ne.s32.totalorder %s188, %s191
      %p197 = scmp.eq.s32.totalorder %s16, 0
      %p198 = por %p196, %p197
      %p199 = scmp.ne.s32.totalorder %s188, %s191
      %p200 = scmp.eq.s32.totalorder %s21, 1
      %p201 = por %p199, %p200
      %p202 = scmp.ne.s32.totalorder %s191, %s192
      %p203 = scmp.eq.s32.totalorder %s21, 0
      %p204 = por %p202, %p203
      %p205 = scmp.ne.s32.totalorder %s191, %s192
      %p206 = scmp.eq.s32.totalorder %s22, 1
      %p207 = por %p205, %p206
      %p209 = scmp.ne.s32.totalorder %s192, %s208
      %p210 = scmp.eq.s32.totalorder %s22, 0
      %p211 = por %p209, %p210
      %p212 = scmp.le.s32.totalorder 1, %s16
      %p213 = scmp.lt.s32.totalorder %s16, 3
      %p214 = pnand %p212, %p213
      %p215 = pneg %p214
      // Predicated region
      $region9: #{tpu_custom_call.1} parent=5 // pred_check
        _
      $region10: #{tpu_custom_call.1} parent=5 // pred_check_branch
        %217 = sbr.rel (%p214) target = $region12
      $region11: #{tpu_custom_call.1} parent=5 // pred_region
        %s218 = ssub.s32 %s16, 1
        // Predicated region
        $region13: #{tpu_custom_call.1} parent=11 // pred_check
          %p219 = pneg %p115
        $region14: #{tpu_custom_call.1} parent=11 // pred_check_branch
          %221 = sbr.rel (%p219) target = $region16
        $region15: #{tpu_custom_call.1} parent=11 // pred_region
          _
        $region16: #{tpu_custom_call.1} parent=11 // pred_fallthru
          _
        // Predicated region
        $region17: #{tpu_custom_call.1} parent=11 // pred_check
          %p222 = pneg %p136
        $region18: #{tpu_custom_call.1} parent=11 // pred_check_branch
          %224 = sbr.rel (%p222) target = $region20
        $region19: #{tpu_custom_call.1} parent=11 // pred_region
          _
        $region20: #{tpu_custom_call.1} parent=11 // pred_fallthru
          _
        // Predicated region
        $region21: #{tpu_custom_call.1} parent=11 // pred_check
          %p225 = pneg %p157
        $region22: #{tpu_custom_call.1} parent=11 // pred_check_branch
          %227 = sbr.rel (%p225) target = $region24
        $region23: #{tpu_custom_call.1} parent=11 // pred_region
          _
        $region24: #{tpu_custom_call.1} parent=11 // pred_fallthru
          _
        // Predicated region
        $region25: #{tpu_custom_call.1} parent=11 // pred_check
          %p228 = pneg %p178
        $region26: #{tpu_custom_call.1} parent=11 // pred_check_branch
          %230 = sbr.rel (%p228) target = $region28
        $region27: #{tpu_custom_call.1} parent=11 // pred_region
          _
        $region28: #{tpu_custom_call.1} parent=11 // pred_fallthru
          _
      $region12: #{tpu_custom_call.1} parent=5 // pred_fallthru
        _
      %p231 = scmp.lt.s32.totalorder %s16, 2
      // Predicated region
      $region29: #{tpu_custom_call.1} parent=5 // pred_check
        %p232 = pneg %p231
      $region30: #{tpu_custom_call.1} parent=5 // pred_check_branch
        %234 = sbr.rel (%p232) target = $region32
      $region31: #{tpu_custom_call.1} parent=5 // pred_region
        // Predicated region
        $region33: #{tpu_custom_call.1} parent=31 // pred_check
          %p235 = pneg %p36
        $region34: #{tpu_custom_call.1} parent=31 // pred_check_branch
          %237 = sbr.rel (%p235) target = $region36
        $region35: #{tpu_custom_call.1} parent=31 // pred_region
          %s238 = smul.u32 8, %s16
          %p239 = scmp.lt.s32.totalorder %s238, 15
          %s240 = scalar_select %p239, %s238, 15
          %s241 = smul.addr %s240, 4
          %s242 = scalar_lea.vmem %s0, %s241
          %s243 = smul.u32 8, %s16
        $region36: #{tpu_custom_call.1} parent=31 // pred_fallthru
          _
        // Predicated region
        $region37: #{tpu_custom_call.1} parent=31 // pred_check
          %p244 = pneg %p62
        $region38: #{tpu_custom_call.1} parent=31 // pred_check_branch
          %246 = sbr.rel (%p244) target = $region40
        $region39: #{tpu_custom_call.1} parent=31 // pred_region
          %p247 = scmp.lt.s32.totalorder %s16, 1
          %s248 = scalar_select %p247, %s16, 1
          %s249 = smul.addr %s248, 4
          %s250 = scalar_lea.vmem %s1, %s249
        $region40: #{tpu_custom_call.1} parent=31 // pred_fallthru
          _
        // Predicated region
        $region41: #{tpu_custom_call.1} parent=31 // pred_check
          %p251 = pneg %p88
        $region42: #{tpu_custom_call.1} parent=31 // pred_check_branch
          %253 = sbr.rel (%p251) target = $region44
        $region43: #{tpu_custom_call.1} parent=31 // pred_region
          %s254 = smul.u32 8, %s16
          %p255 = scmp.lt.s32.totalorder %s254, 15
          %s256 = scalar_select %p255, %s254, 15
          %s257 = smul.addr %s256, 8
          %s258 = scalar_lea.vmem %s2, %s257
          %s259 = smul.u32 8, %s16
        $region44: #{tpu_custom_call.1} parent=31 // pred_fallthru
          _
      $region32: #{tpu_custom_call.1} parent=5 // pred_fallthru
        _
      %p260 = scmp.le.s32.totalorder 1, %s16
      %p261 = scmp.lt.s32.totalorder %s16, 3
      %p262 = pnand %p260, %p261
      %p263 = pneg %p262
      // Predicated region
      $region45: #{tpu_custom_call.1} parent=5 // pred_check
        _
      $region46: #{tpu_custom_call.1} parent=5 // pred_check_branch
        %265 = sbr.rel (%p262) target = $region48
      $region47: #{tpu_custom_call.1} parent=5 // pred_region
        %s266 = ssub.s32 %s16, 1
        %s267 = smul.u32 8, %s21
        %p268 = scmp.lt.s32.totalorder %s267, 15
        %s269 = scalar_select %p268, %s267, 15
        %s270 = smul.addr %s269, 4
        %s271 = scalar_lea.vmem %s0, %s270
        %p272 = pneg %p42
        %p273 = pneg %p39
        %p274 = scmp.lt.s32.totalorder %s21, 1
        %s275 = scalar_select %p274, %s21, 1
        %s276 = smul.addr %s275, 4
        %s277 = scalar_lea.vmem %s1, %s276
        %p278 = pneg %p68
        %p279 = pneg %p65
        %s280 = smul.u32 8, %s21
        %p281 = scmp.lt.s32.totalorder %s280, 15
        %s282 = scalar_select %p281, %s280, 15
        %s283 = smul.addr %s282, 8
        %s284 = scalar_lea.vmem %s2, %s283
        %p285 = pneg %p94
        %p286 = pneg %p91
        %p287 = pneg %p115
        %p288 = pneg %p112
        %p289 = pneg %p136
        %p290 = pneg %p133
        %p291 = pneg %p157
        %p292 = pneg %p154
        %p293 = pneg %p178
        %p294 = pneg %p175
        %p295 = pneg %p204
        %p296 = pneg %p201
        %s297 = sand.u32 %s191, 1
        %s298 = scalar_lea.sflag [#allocation3], %s297
        %s299 = sand.u32 %s191, 1
        %s300 = smul.addr %s299, 8
        %s301 = scalar_lea.vmem [#allocation2], %s300
        %s302 = smul.u32 8, %s21
        %p303 = scmp.lt.s32.totalorder %s302, 15
        %s304 = scalar_select %p303, %s302, 15
        %s305 = smul.addr %s304, 4
        %s306 = scalar_lea.vmem %s0, %s305
        %s307 = smul.u32 8, %s21
        %p308 = scmp.lt.s32.totalorder %s21, 1
        %s309 = scalar_select %p308, %s21, 1
        %s310 = smul.addr %s309, 4
        %s311 = scalar_lea.vmem %s1, %s310
        %s312 = smul.u32 8, %s21
        %p313 = scmp.lt.s32.totalorder %s312, 15
        %s314 = scalar_select %p313, %s312, 15
        %s315 = smul.addr %s314, 8
        %s316 = scalar_lea.vmem %s2, %s315
        %s317 = smul.u32 8, %s21
        %v319 = vld [vmem:[%s306] sm:$0xf]
        %v320 = vld [vmem:[%s306 + $0x4] sm:$0xf]
        %v321 = vld [vmem:[%s306 + $0x8] sm:$0xf]
        %v322 = vld [vmem:[%s306 + $0xc] sm:$0xf]
        %v323 = vld [vmem:[%s306 + $0x10] sm:$0xf]
        %v324 = vld [vmem:[%s306 + $0x14] sm:$0xf]
        %v325 = vld [vmem:[%s306 + $0x18] sm:$0xf]
        %v326 = vld [vmem:[%s306 + $0x1c] sm:$0xf]
        %v327 = vld [vmem:[%s311] sm:$0xf]
        %v328 = vld [vmem:[%s4] sm:$0xf]
        %v329 = vld [vmem:[%s4 + $0x4] sm:$0xf]
        %v330 = vld [vmem:[%s4 + $0x8] sm:$0xf]
        %v331 = vld [vmem:[%s4 + $0xc] sm:$0xf]
        %v332 = vld [vmem:[%s5] sm:$0x1]
        %v334 = vlaneseq
        %v335 = vshrl.u32 %v334, 7
        %v336 = vsub.s32 0, %v335
        %v337 = vrot.slane %v332, %v336
        %v343 = vunpack.c.l.b16 %v328
        %v344 = vunpack.c.l.b16 %v329
        %v345 = vunpack.c.l.b16 %v330
        %v346 = vunpack.c.l.b16 %v331
        %v347 = vpack.c.b16 %v344, %v343
        %v348 = vpack.c.b16 %v346, %v345
        %vm351 = vcmask 261120
        %v353 = vsel %vm351, %v327, 0
        %355 = vmatprep.subr.bf16.mxu0 0
        %356 = vmatpush1.bf16.msra.mxu0 %v347
        %357 = vmatprep.subr.bf16.mxu0 0
        %358 = vmatpush1.bf16.msra.mxu0 %v348
        %359 = vmatprep.subr.bf16.mxu0 0
        %360 = vmatpush1.bf16.msra.mxu0 0
        %361 = vmatprep.subr.bf16.mxu0 0
        %362 = vmatpush1.bf16.msra.mxu0 0
        %363 = vmatprep.subr.bf16.mxu0 0
        %364 = vmatpush1.bf16.msra.mxu0 0
        %365 = vmatprep.subr.bf16.mxu0 0
        %366 = vmatpush1.bf16.msra.mxu0 0
        %367 = vmatprep.subr.bf16.mxu0 0
        %368 = vmatpush1.bf16.msra.mxu0 0
        %369 = vmatprep.subr.bf16.mxu0 0
        %370 = vmatpush1.bf16.msra.mxu0 0
        %371 = vmatprep.subr.bf16.mxu0 0
        %372 = vmatpush1.bf16.msra.mxu0 0
        %373 = vmatprep.subr.bf16.mxu0 0
        %374 = vmatpush1.bf16.msra.mxu0 0
        %375 = vmatprep.subr.bf16.mxu0 0
        %376 = vmatpush1.bf16.msra.mxu0 0
        %377 = vmatprep.subr.bf16.mxu0 0
        %378 = vmatpush1.bf16.msra.mxu0 0
        %379 = vmatprep.subr.bf16.mxu0 0
        %380 = vmatpush1.bf16.msra.mxu0 0
        %381 = vmatprep.subr.bf16.mxu0 0
        %382 = vmatpush1.bf16.msra.mxu0 0
        %383 = vmatprep.subr.bf16.mxu0 0
        %384 = vmatpush1.bf16.msra.mxu0 0
        %385 = vmatprep.subr.bf16.mxu0 0
        %386 = vmatpush1.bf16.msra.mxu0 0
        %387 = vmatprep.mubr.bf16.mxu0 0
        %388 = vmatmul.mubr.bf16.gmra.mrb[0].mxu0 %v353
        %v389 = vpop.f32.mrb[0].mxu0
        %v390 = vadd.f32 %v337, %v389
        %v391 = vpop.f32.mrb[0].mxu0
        %v392 = vpop.f32.mrb[0].mxu0
        %v393 = vpop.f32.mrb[0].mxu0
        %394 = vdwg.mxu0
        %v395 = vld [vmem:[%s3] sm:$0xf]
        %v396 = vld [vmem:[%s3 + $0x4] sm:$0xf]
        %v397 = vld [vmem:[%s3 + $0x8] sm:$0xf]
        %v398 = vld [vmem:[%s3 + $0xc] sm:$0xf]
        %v407 = vunpack.c.l.b16 %v319
        %v408 = vunpack.c.l.b16 %v320
        %v409 = vunpack.c.l.b16 %v321
        %v410 = vunpack.c.l.b16 %v322
        %v411 = vunpack.c.l.b16 %v323
        %v412 = vunpack.c.l.b16 %v324
        %v413 = vunpack.c.l.b16 %v325
        %v414 = vunpack.c.l.b16 %v326
        %v415 = vpack.c.b16 %v408, %v407
        %v416 = vpack.c.b16 %v410, %v409
        %v417 = vpack.c.b16 %v412, %v411
        %v418 = vpack.c.b16 %v414, %v413
        %v423 = vunpack.c.l.b16 %v395
        %v424 = vunpack.c.l.b16 %v396
        %v425 = vunpack.c.l.b16 %v397
        %v426 = vunpack.c.l.b16 %v398
        %v427 = vpack.c.b16 %v424, %v423
        %v428 = vpack.c.b16 %v426, %v425
        %v432 = vsel %vm351, %v415, 0
        %v435 = vsel %vm351, %v416, 0
        %v438 = vsel %vm351, %v417, 0
        %v441 = vsel %vm351, %v418, 0
        %443 = vmatprep.subr.bf16.mxu0 0
        %444 = vmatpush1.bf16.msra.mxu0 %v427
        %445 = vmatprep.subr.bf16.mxu0 0
        %446 = vmatpush1.bf16.msra.mxu0 %v428
        %447 = vmatprep.subr.bf16.mxu0 0
        %448 = vmatpush1.bf16.msra.mxu0 0
        %449 = vmatprep.subr.bf16.mxu0 0
        %450 = vmatpush1.bf16.msra.mxu0 0
        %451 = vmatprep.subr.bf16.mxu0 0
        %452 = vmatpush1.bf16.msra.mxu0 0
        %453 = vmatprep.subr.bf16.mxu0 0
        %454 = vmatpush1.bf16.msra.mxu0 0
        %455 = vmatprep.subr.bf16.mxu0 0
        %456 = vmatpush1.bf16.msra.mxu0 0
        %457 = vmatprep.subr.bf16.mxu0 0
        %458 = vmatpush1.bf16.msra.mxu0 0
        %459 = vmatprep.subr.bf16.mxu0 0
        %460 = vmatpush1.bf16.msra.mxu0 0
        %461 = vmatprep.subr.bf16.mxu0 0
        %462 = vmatpush1.bf16.msra.mxu0 0
        %463 = vmatprep.subr.bf16.mxu0 0
        %464 = vmatpush1.bf16.msra.mxu0 0
        %465 = vmatprep.subr.bf16.mxu0 0
        %466 = vmatpush1.bf16.msra.mxu0 0
        %467 = vmatprep.subr.bf16.mxu0 0
        %468 = vmatpush1.bf16.msra.mxu0 0
        %469 = vmatprep.subr.bf16.mxu0 0
        %470 = vmatpush1.bf16.msra.mxu0 0
        %471 = vmatprep.subr.bf16.mxu0 0
        %472 = vmatpush1.bf16.msra.mxu0 0
        %473 = vmatprep.subr.bf16.mxu0 0
        %474 = vmatpush1.bf16.msra.mxu0 0
        %475 = vmatprep.mubr.bf16.mxu0 0
        %476 = vmatmul.mubr.bf16.gmra.mrb[0].mxu0 %v432
        %v477 = vpop.f32.mrb[0].mxu0
        %v478 = vadd.f32 0.0, %v477
        %v479 = vpop.f32.mrb[0].mxu0
        %v480 = vpop.f32.mrb[0].mxu0
        %v481 = vadd.f32 0.0, %v480
        %v482 = vpop.f32.mrb[0].mxu0
        %483 = vmatprep.mubr.bf16.mxu0 0
        %484 = vmatmul.mubr.bf16.gmra.mrb[0].mxu0 %v435
        %v485 = vpop.f32.mrb[0].mxu0
        %v486 = vadd.f32 0.0, %v485
        %v487 = vpop.f32.mrb[0].mxu0
        %v488 = vpop.f32.mrb[0].mxu0
        %v489 = vadd.f32 0.0, %v488
        %v490 = vpop.f32.mrb[0].mxu0
        %491 = vmatprep.mubr.bf16.mxu0 0
        %492 = vmatmul.mubr.bf16.gmra.mrb[0].mxu0 %v438
        %v493 = vpop.f32.mrb[0].mxu0
        %v494 = vadd.f32 0.0, %v493
        %v495 = vpop.f32.mrb[0].mxu0
        %v496 = vpop.f32.mrb[0].mxu0
        %v497 = vadd.f32 0.0, %v496
        %v498 = vpop.f32.mrb[0].mxu0
        %499 = vmatprep.mubr.bf16.mxu0 0
        %500 = vmatmul.mubr.bf16.gmra.mrb[0].mxu0 %v441
        %v501 = vpop.f32.mrb[0].mxu0
        %v502 = vadd.f32 0.0, %v501
        %v503 = vpop.f32.mrb[0].mxu0
        %v504 = vpop.f32.mrb[0].mxu0
        %v505 = vadd.f32 0.0, %v504
        %v506 = vpop.f32.mrb[0].mxu0
        %507 = vdwg.mxu0
        %v509 = vcombine.high %v390, %v390
        %v511 = vunpack.c.l.s4 1966171168
        %v512 = vunpack.c.0.s8 %v511
        %v513 = vlaneseq
        %v514 = vshrl.u32 %v513, 7
        %v515 = vsub.s32 %v512, %v514
        %v516 = vrot.slane %v390, %v515
        %v518 = vunpack.c.l.s4 1966171168
        %v519 = vunpack.c.0.s8 %v518
        %v520 = vlaneseq
        %v521 = vshrl.u32 %v520, 7
        %v522 = vsub.s32 %v519, %v521
        %v523 = vrot.slane %v509, %v522
        %v524 = vcombine.high %v516, %v516
        %v525 = vcombine.high %v523, %v523
        %v527 = vunpack.c.l.s4 1966171168
        %v528 = vunpack.c.0.s8 %v527
        %v529 = vlaneseq
        %v530 = vshrl.u32 %v529, 7
        %v531 = vsub.s32 %v528, %v530
        %v532 = vrot.slane %v516, %v531
        %v534 = vunpack.c.l.s4 1966171168
        %v535 = vunpack.c.0.s8 %v534
        %v536 = vlaneseq
        %v537 = vshrl.u32 %v536, 7
        %v538 = vsub.s32 %v535, %v537
        %v539 = vrot.slane %v523, %v538
        %v541 = vunpack.c.l.s4 1966171168
        %v542 = vunpack.c.0.s8 %v541
        %v543 = vlaneseq
        %v544 = vshrl.u32 %v543, 7
        %v545 = vsub.s32 %v542, %v544
        %v546 = vrot.slane %v524, %v545
        %v548 = vunpack.c.l.s4 1966171168
        %v549 = vunpack.c.0.s8 %v548
        %v550 = vlaneseq
        %v551 = vshrl.u32 %v550, 7
        %v552 = vsub.s32 %v549, %v551
        %v553 = vrot.slane %v525, %v552
        %v554 = vcombine.high %v532, %v532
        %v555 = vcombine.high %v539, %v539
        %v556 = vcombine.high %v546, %v546
        %v557 = vcombine.high %v553, %v553
        %v558 = vlaneseq
        %v559 = vshrl.u32 %v558, 7
        %v560 = vsub.s32 0, %v559
        %v561 = vrot.slane %v532, %v560
        %v562 = vlaneseq
        %v563 = vshrl.u32 %v562, 7
        %v564 = vsub.s32 0, %v563
        %v565 = vrot.slane %v546, %v564
        %v566 = vlaneseq
        %v567 = vshrl.u32 %v566, 7
        %v568 = vsub.s32 0, %v567
        %v569 = vrot.slane %v554, %v568
        %v570 = vlaneseq
        %v571 = vshrl.u32 %v570, 7
        %v572 = vsub.s32 0, %v571
        %v573 = vrot.slane %v556, %v572
        %v574 = vlaneseq
        %v575 = vshrl.u32 %v574, 7
        %v576 = vsub.s32 0, %v575
        %v577 = vrot.slane %v539, %v576
        %v578 = vlaneseq
        %v579 = vshrl.u32 %v578, 7
        %v580 = vsub.s32 0, %v579
        %v581 = vrot.slane %v553, %v580
        %v582 = vlaneseq
        %v583 = vshrl.u32 %v582, 7
        %v584 = vsub.s32 0, %v583
        %v585 = vrot.slane %v555, %v584
        %v586 = vlaneseq
        %v587 = vshrl.u32 %v586, 7
        %v588 = vsub.s32 0, %v587
        %v589 = vrot.slane %v557, %v588
        %v598 = vadd.f32 %v478, %v561
        %v599 = vadd.f32 %v481, %v565
        %v600 = vadd.f32 %v486, %v569
        %v601 = vadd.f32 %v489, %v573
        %v602 = vadd.f32 %v494, %v577
        %v603 = vadd.f32 %v497, %v581
        %v604 = vadd.f32 %v502, %v585
        %v605 = vadd.f32 %v505, %v589
        %v606 = vmax.f32 %v598, 0.0
        %v607 = vmax.f32 %v599, 0.0
        %v608 = vmax.f32 %v600, 0.0
        %v609 = vmax.f32 %v601, 0.0
        %v610 = vmax.f32 %v602, 0.0
        %v611 = vmax.f32 %v603, 0.0
        %v612 = vmax.f32 %v604, 0.0
        %v613 = vmax.f32 %v605, 0.0
        %v614 = vld [vmem:[%s6] sm:$0x1]
        %v616 = vlaneseq
        %v617 = vshrl.u32 %v616, 7
        %v618 = vsub.s32 0, %v617
        %v619 = vrot.slane %v614, %v618
        %v621 = vmul.f32 %v606, %v619
        %v622 = vmul.f32 %v607, %v619
        %v623 = vmul.f32 %v608, %v619
        %v624 = vmul.f32 %v609, %v619
        %v625 = vmul.f32 %v610, %v619
        %v626 = vmul.f32 %v611, %v619
        %v627 = vmul.f32 %v612, %v619
        %v628 = vmul.f32 %v613, %v619
        %v629 = vsel %vm351, %v621, 0.0
        %630 = vadd.xlane.f32.xlu0 %v629
        %v631 = vpop.xlane.xlu0 %630
        %v632 = vsel %vm351, %v622, 0.0
        %633 = vadd.xlane.f32.xlu0 %v632
        %v634 = vpop.xlane.xlu0 %633
        %v635 = vsel %vm351, %v623, 0.0
        %636 = vadd.xlane.f32.xlu0 %v635
        %v637 = vpop.xlane.xlu0 %636
        %v638 = vsel %vm351, %v624, 0.0
        %639 = vadd.xlane.f32.xlu0 %v638
        %v640 = vpop.xlane.xlu0 %639
        %v641 = vsel %vm351, %v625, 0.0
        %642 = vadd.xlane.f32.xlu0 %v641
        %v643 = vpop.xlane.xlu0 %642
        %v644 = vsel %vm351, %v626, 0.0
        %645 = vadd.xlane.f32.xlu0 %v644
        %v646 = vpop.xlane.xlu0 %645
        %v647 = vsel %vm351, %v627, 0.0
        %648 = vadd.xlane.f32.xlu0 %v647
        %v649 = vpop.xlane.xlu0 %648
        %v650 = vsel %vm351, %v628, 0.0
        %651 = vadd.xlane.f32.xlu0 %v650
        %v652 = vpop.xlane.xlu0 %651
        %v653 = vld [vmem:[%s316] sm:$0xff]
        %v654 = vld [vmem:[%s316 + $0x8] sm:$0xff]
        %v655 = vld [vmem:[%s316 + $0x10] sm:$0xff]
        %v656 = vld [vmem:[%s316 + $0x18] sm:$0xff]
        %v657 = vld [vmem:[%s316 + $0x20] sm:$0xff]
        %v658 = vld [vmem:[%s316 + $0x28] sm:$0xff]
        %v659 = vld [vmem:[%s316 + $0x30] sm:$0xff]
        %v660 = vld [vmem:[%s316 + $0x38] sm:$0xff]
        %v661 = vadd.f32 %v631, %v653
        %v662 = vadd.f32 %v634, %v654
        %v663 = vadd.f32 %v637, %v655
        %v664 = vadd.f32 %v640, %v656
        %v665 = vadd.f32 %v643, %v657
        %v666 = vadd.f32 %v646, %v658
        %v667 = vadd.f32 %v649, %v659
        %v668 = vadd.f32 %v652, %v660
        %vm669 = vcmask 7168
        %v670 = vsel %vm669, %v661, -inf
        %v671 = vrot.slane %v670, 4
        %v672 = vmax.f32 %v670, %v671
        %v673 = vrot.slane %v672, 2
        %v674 = vmax.f32 %v672, %v673
        %v675 = vrot.slane %v674, 1
        %v676 = vmax.f32 %v674, %v675
        %v677 = vsel %vm669, %v662, -inf
        %v678 = vrot.slane %v677, 4
        %v679 = vmax.f32 %v677, %v678
        %v680 = vrot.slane %v679, 2
        %v681 = vmax.f32 %v679, %v680
        %v682 = vrot.slane %v681, 1
        %v683 = vmax.f32 %v681, %v682
        %v684 = vsel %vm669, %v663, -inf
        %v685 = vrot.slane %v684, 4
        %v686 = vmax.f32 %v684, %v685
        %v687 = vrot.slane %v686, 2
        %v688 = vmax.f32 %v686, %v687
        %v689 = vrot.slane %v688, 1
        %v690 = vmax.f32 %v688, %v689
        %v691 = vsel %vm669, %v664, -inf
        %v692 = vrot.slane %v691, 4
        %v693 = vmax.f32 %v691, %v692
        %v694 = vrot.slane %v693, 2
        %v695 = vmax.f32 %v693, %v694
        %v696 = vrot.slane %v695, 1
        %v697 = vmax.f32 %v695, %v696
        %v698 = vsel %vm669, %v665, -inf
        %v699 = vrot.slane %v698, 4
        %v700 = vmax.f32 %v698, %v699
        %v701 = vrot.slane %v700, 2
        %v702 = vmax.f32 %v700, %v701
        %v703 = vrot.slane %v702, 1
        %v704 = vmax.f32 %v702, %v703
        %v705 = vsel %vm669, %v666, -inf
        %v706 = vrot.slane %v705, 4
        %v707 = vmax.f32 %v705, %v706
        %v708 = vrot.slane %v707, 2
        %v709 = vmax.f32 %v707, %v708
        %v710 = vrot.slane %v709, 1
        %v711 = vmax.f32 %v709, %v710
        %v712 = vsel %vm669, %v667, -inf
        %v713 = vrot.slane %v712, 4
        %v714 = vmax.f32 %v712, %v713
        %v715 = vrot.slane %v714, 2
        %v716 = vmax.f32 %v714, %v715
        %v717 = vrot.slane %v716, 1
        %v718 = vmax.f32 %v716, %v717
        %v719 = vsel %vm669, %v668, -inf
        %v720 = vrot.slane %v719, 4
        %v721 = vmax.f32 %v719, %v720
        %v722 = vrot.slane %v721, 2
        %v723 = vmax.f32 %v721, %v722
        %v724 = vrot.slane %v723, 1
        %v725 = vmax.f32 %v723, %v724
        %v726 = vsub.f32 %v661, %v676
        %v727 = vsub.f32 %v662, %v683
        %v728 = vsub.f32 %v663, %v690
        %v729 = vsub.f32 %v664, %v697
        %v730 = vsub.f32 %v665, %v704
        %v731 = vsub.f32 %v666, %v711
        %v732 = vsub.f32 %v667, %v718
        %v733 = vsub.f32 %v668, %v725
        %v734 = vmul.f32 %v726, 1.442695
        %v735 = vpow.pop %v734
        %v736 = vmul.f32 %v727, 1.442695
        %v737 = vpow.pop %v736
        %v738 = vmul.f32 %v728, 1.442695
        %v739 = vpow.pop %v738
        %v740 = vmul.f32 %v729, 1.442695
        %v741 = vpow.pop %v740
        %v742 = vmul.f32 %v730, 1.442695
        %v743 = vpow.pop %v742
        %v744 = vmul.f32 %v731, 1.442695
        %v745 = vpow.pop %v744
        %v746 = vmul.f32 %v732, 1.442695
        %v747 = vpow.pop %v746
        %v748 = vmul.f32 %v733, 1.442695
        %v749 = vpow.pop %v748
        %v750 = vsel %vm669, %v735, 0.0
        %v751 = vrot.slane %v750, 4
        %v752 = vadd.f32 %v750, %v751
        %v753 = vrot.slane %v752, 2
        %v754 = vadd.f32 %v752, %v753
        %v755 = vrot.slane %v754, 1
        %v756 = vadd.f32 %v754, %v755
        %v757 = vsel %vm669, %v737, 0.0
        %v758 = vrot.slane %v757, 4
        %v759 = vadd.f32 %v757, %v758
        %v760 = vrot.slane %v759, 2
        %v761 = vadd.f32 %v759, %v760
        %v762 = vrot.slane %v761, 1
        %v763 = vadd.f32 %v761, %v762
        %v764 = vsel %vm669, %v739, 0.0
        %v765 = vrot.slane %v764, 4
        %v766 = vadd.f32 %v764, %v765
        %v767 = vrot.slane %v766, 2
        %v768 = vadd.f32 %v766, %v767
        %v769 = vrot.slane %v768, 1
        %v770 = vadd.f32 %v768, %v769
        %v771 = vsel %vm669, %v741, 0.0
        %v772 = vrot.slane %v771, 4
        %v773 = vadd.f32 %v771, %v772
        %v774 = vrot.slane %v773, 2
        %v775 = vadd.f32 %v773, %v774
        %v776 = vrot.slane %v775, 1
        %v777 = vadd.f32 %v775, %v776
        %v778 = vsel %vm669, %v743, 0.0
        %v779 = vrot.slane %v778, 4
        %v780 = vadd.f32 %v778, %v779
        %v781 = vrot.slane %v780, 2
        %v782 = vadd.f32 %v780, %v781
        %v783 = vrot.slane %v782, 1
        %v784 = vadd.f32 %v782, %v783
        %v785 = vsel %vm669, %v745, 0.0
        %v786 = vrot.slane %v785, 4
        %v787 = vadd.f32 %v785, %v786
        %v788 = vrot.slane %v787, 2
        %v789 = vadd.f32 %v787, %v788
        %v790 = vrot.slane %v789, 1
        %v791 = vadd.f32 %v789, %v790
        %v792 = vsel %vm669, %v747, 0.0
        %v793 = vrot.slane %v792, 4
        %v794 = vadd.f32 %v792, %v793
        %v795 = vrot.slane %v794, 2
        %v796 = vadd.f32 %v794, %v795
        %v797 = vrot.slane %v796, 1
        %v798 = vadd.f32 %v796, %v797
        %v799 = vsel %vm669, %v749, 0.0
        %v800 = vrot.slane %v799, 4
        %v801 = vadd.f32 %v799, %v800
        %v802 = vrot.slane %v801, 2
        %v803 = vadd.f32 %v801, %v802
        %v804 = vrot.slane %v803, 1
        %v805 = vadd.f32 %v803, %v804
        %v806 = vunpack.c.l.bf16 %v319
        %v807 = vunpack.c.l.bf16 %v320
        %v808 = vunpack.c.l.bf16 %v321
        %v809 = vunpack.c.l.bf16 %v322
        %v810 = vunpack.c.l.bf16 %v323
        %v811 = vunpack.c.l.bf16 %v324
        %v812 = vunpack.c.l.bf16 %v325
        %v813 = vunpack.c.l.bf16 %v326
        %815 = vset.pattern.permute.xlu0 0
        %816 = vperm.xlu0 %815, %v735
        %v817 = vpop.permute.xlu0 %816
        %820 = vset.pattern.permute.xlu0 0
        %821 = vperm.xlu0 %820, %v737
        %v822 = vpop.permute.xlu0 %821
        %825 = vset.pattern.permute.xlu0 0
        %826 = vperm.xlu0 %825, %v739
        %v827 = vpop.permute.xlu0 %826
        %830 = vset.pattern.permute.xlu0 0
        %831 = vperm.xlu0 %830, %v741
        %v832 = vpop.permute.xlu0 %831
        %835 = vset.pattern.permute.xlu0 0
        %836 = vperm.xlu0 %835, %v743
        %v837 = vpop.permute.xlu0 %836
        %840 = vset.pattern.permute.xlu0 0
        %841 = vperm.xlu0 %840, %v745
        %v842 = vpop.permute.xlu0 %841
        %845 = vset.pattern.permute.xlu0 0
        %846 = vperm.xlu0 %845, %v747
        %v847 = vpop.permute.xlu0 %846
        %850 = vset.pattern.permute.xlu0 0
        %851 = vperm.xlu0 %850, %v749
        %v852 = vpop.permute.xlu0 %851
        %v854 = vmul.f32 %v817, %v806
        %v855 = vmul.f32 %v822, %v807
        %v856 = vmul.f32 %v827, %v808
        %v857 = vmul.f32 %v832, %v809
        %v858 = vmul.f32 %v837, %v810
        %v859 = vmul.f32 %v842, %v811
        %v860 = vmul.f32 %v847, %v812
        %v861 = vmul.f32 %v852, %v813
        %v862 = vsel %vm351, %v854, 0.0
        %v863 = vrot.slane %v862, 4
        %v864 = vadd.f32 %v862, %v863
        %v865 = vrot.slane %v864, 2
        %v866 = vadd.f32 %v864, %v865
        %v867 = vrot.slane %v866, 1
        %v868 = vadd.f32 %v866, %v867
        %v869 = vsel %vm351, %v855, 0.0
        %v870 = vrot.slane %v869, 4
        %v871 = vadd.f32 %v869, %v870
        %v872 = vrot.slane %v871, 2
        %v873 = vadd.f32 %v871, %v872
        %v874 = vrot.slane %v873, 1
        %v875 = vadd.f32 %v873, %v874
        %v876 = vsel %vm351, %v856, 0.0
        %v877 = vrot.slane %v876, 4
        %v878 = vadd.f32 %v876, %v877
        %v879 = vrot.slane %v878, 2
        %v880 = vadd.f32 %v878, %v879
        %v881 = vrot.slane %v880, 1
        %v882 = vadd.f32 %v880, %v881
        %v883 = vsel %vm351, %v857, 0.0
        %v884 = vrot.slane %v883, 4
        %v885 = vadd.f32 %v883, %v884
        %v886 = vrot.slane %v885, 2
        %v887 = vadd.f32 %v885, %v886
        %v888 = vrot.slane %v887, 1
        %v889 = vadd.f32 %v887, %v888
        %v890 = vsel %vm351, %v858, 0.0
        %v891 = vrot.slane %v890, 4
        %v892 = vadd.f32 %v890, %v891
        %v893 = vrot.slane %v892, 2
        %v894 = vadd.f32 %v892, %v893
        %v895 = vrot.slane %v894, 1
        %v896 = vadd.f32 %v894, %v895
        %v897 = vsel %vm351, %v859, 0.0
        %v898 = vrot.slane %v897, 4
        %v899 = vadd.f32 %v897, %v898
        %v900 = vrot.slane %v899, 2
        %v901 = vadd.f32 %v899, %v900
        %v902 = vrot.slane %v901, 1
        %v903 = vadd.f32 %v901, %v902
        %v904 = vsel %vm351, %v860, 0.0
        %v905 = vrot.slane %v904, 4
        %v906 = vadd.f32 %v904, %v905
        %v907 = vrot.slane %v906, 2
        %v908 = vadd.f32 %v906, %v907
        %v909 = vrot.slane %v908, 1
        %v910 = vadd.f32 %v908, %v909
        %v911 = vsel %vm351, %v861, 0.0
        %v912 = vrot.slane %v911, 4
        %v913 = vadd.f32 %v911, %v912
        %v914 = vrot.slane %v913, 2
        %v915 = vadd.f32 %v913, %v914
        %v916 = vrot.slane %v915, 1
        %v917 = vadd.f32 %v915, %v916
        %v918 = vrcp.pop %v756
        %v919 = vrcp.pop %v763
        %v920 = vrcp.pop %v770
        %v921 = vrcp.pop %v777
        %v922 = vrcp.pop %v784
        %v923 = vrcp.pop %v791
        %v924 = vrcp.pop %v798
        %v925 = vrcp.pop %v805
        %927 = vset.pattern.permute.xlu0 0
        %928 = vperm.xlu0 %927, %v918
        %v929 = vpop.permute.xlu0 %928
        %932 = vset.pattern.permute.xlu0 0
        %933 = vperm.xlu0 %932, %v919
        %v934 = vpop.permute.xlu0 %933
        %937 = vset.pattern.permute.xlu0 0
        %938 = vperm.xlu0 %937, %v920
        %v939 = vpop.permute.xlu0 %938
        %942 = vset.pattern.permute.xlu0 0
        %943 = vperm.xlu0 %942, %v921
        %v944 = vpop.permute.xlu0 %943
        %947 = vset.pattern.permute.xlu0 0
        %948 = vperm.xlu0 %947, %v922
        %v949 = vpop.permute.xlu0 %948
        %952 = vset.pattern.permute.xlu0 0
        %953 = vperm.xlu0 %952, %v923
        %v954 = vpop.permute.xlu0 %953
        %957 = vset.pattern.permute.xlu0 0
        %958 = vperm.xlu0 %957, %v924
        %v959 = vpop.permute.xlu0 %958
        %962 = vset.pattern.permute.xlu0 0
        %963 = vperm.xlu0 %962, %v925
        %v964 = vpop.permute.xlu0 %963
        %v966 = vmul.f32 %v868, %v929
        %v967 = vmul.f32 %v875, %v934
        %v968 = vmul.f32 %v882, %v939
        %v969 = vmul.f32 %v889, %v944
        %v970 = vmul.f32 %v896, %v949
        %v971 = vmul.f32 %v903, %v954
        %v972 = vmul.f32 %v910, %v959
        %v973 = vmul.f32 %v917, %v964
        %vm982 = vcmask 1041409
        %v983 = vsel %vm982, %v967, %v966
        %vm984 = vcmask 1042434
        %v985 = vsel %vm984, %v968, %v983
        %vm986 = vcmask 1043459
        %v987 = vsel %vm986, %v969, %v985
        %vm988 = vcmask 1044484
        %v989 = vsel %vm988, %v970, %v987
        %vm990 = vcmask 1045509
        %v991 = vsel %vm990, %v971, %v989
        %vm992 = vcmask 1046534
        %v993 = vsel %vm992, %v972, %v991
        %vm994 = vcmask 1047559
        %v995 = vsel %vm994, %v973, %v993
        %997 = vst.msk [vmem:[%s301] sm:$0xff] %vm351, %v995
        %s998 = sand.u32 %s191, 1
        %s999 = scalar_lea.sflag [#allocation3], %s998
        %s1000 = sand.u32 %s191, 1
        %s1001 = smul.addr %s1000, 8
        %s1002 = scalar_lea.vmem [#allocation2], %s1001
        // Predicated region
        $region49: #{tpu_custom_call.1} parent=47 // pred_check
          %p1003 = pneg %p201
        $region50: #{tpu_custom_call.1} parent=47 // pred_check_branch
          %1005 = sbr.rel (%p1003) target = $region52
        $region51: #{tpu_custom_call.1} parent=47 // pred_region
          %s1007 = ssub.s32 128, 128
          %1008 = vsyncadd %s999, %s1007
          %s1009 = smul.addr %s21, 128
          %s1010 = scalar_lea.hbm %s7, %s1009
          %s1012 = sshll.u32 %s1002, 4
          %s1013 = int_to_ptr.vmem [resolvable:$true] %s1012
          %1015 = dma.vmem_to_hbm [thread:$0]  %s1013, 128, %s1010, %s999
        $region52: #{tpu_custom_call.1} parent=47 // pred_fallthru
          _
      $region48: #{tpu_custom_call.1} parent=5 // pred_fallthru
        _
      %p1016 = scmp.le.s32.totalorder 2, %s16
      // Predicated region
      $region53: #{tpu_custom_call.1} parent=5 // pred_check
        %p1017 = pneg %p1016
      $region54: #{tpu_custom_call.1} parent=5 // pred_check_branch
        %1019 = sbr.rel (%p1017) target = $region56
      $region55: #{tpu_custom_call.1} parent=5 // pred_region
        %s1020 = ssub.s32 %s16, 2
        // Predicated region
        $region57: #{tpu_custom_call.1} parent=55 // pred_check
          %p1021 = pneg %p207
        $region58: #{tpu_custom_call.1} parent=55 // pred_check_branch
          %1023 = sbr.rel (%p1021) target = $region60
        $region59: #{tpu_custom_call.1} parent=55 // pred_region
          %s1024 = sand.u32 %s192, 1
          %s1025 = scalar_lea.sflag [#allocation3], %s1024
          %s1026 = sand.u32 %s192, 1
          %s1027 = smul.addr %s1026, 8
          %s1028 = scalar_lea.vmem [#allocation2], %s1027
          %1029 = dma.done %s1025, 128
        $region60: #{tpu_custom_call.1} parent=55 // pred_fallthru
          _
      $region56: #{tpu_custom_call.1} parent=5 // pred_fallthru
        _
    $region6: #{tpu_custom_call.1} parent=1 // loop_footer
      %s20 = sadd.s32 1, %s16
    $region7: #{tpu_custom_call.1} parent=1 // loop_footer_branch
      %15 = sbr.rel target = $region3
    $region8: #{tpu_custom_call.1} parent=1 // loop_exit
      _
    %1030 = vsyncpa [#allocation3], 1
    %s1031 = scalar_lea.sflag [#allocation3], 1
    %1032 = vsyncpa %s1031, 1

</llo_original>
